<compile_context>
chip_gen: v7x
topology: tpu7x:2x2x1
jax: 0.10.0
libtpu: 0.0.40
codegen_flags: <defaults>
</compile_context>

<pallas_src>
import math

import jax
import jax.numpy as jnp
from jax.experimental import pallas as pl
from jax.experimental.pallas import tpu as pltpu  # noqa: F401  (TPU backend assumed)

# ----- problem sizes (small, consistent with the module) -----
B = 2            # batch
N = 8            # sequence length
DIM = 32         # embedding dim
HEADS = 4
DIM_HEAD = 8
INNER = HEADS * DIM_HEAD          # 32; project_out == True (not (heads==1 and dim_head==dim))
SCALE = DIM_HEAD ** (-0.5)


# ---------------------------------------------------------------------------
# kernel: full multi-head attention for the whole (B, N, D) block in one step
# ---------------------------------------------------------------------------
def attention_kernel(x_ref, wq_ref, wk_ref, wv_ref, wo_ref, bo_ref, o_ref):
    # x:  (B, N, D)
    # wq/wk/wv: (H, D, Dh)   -- per-head slices of to_qkv, leading head axis
    # wo: (H, Dh, D)         -- per-head slices of to_out weight
    # bo: (1, D)             -- to_out bias
    x = x_ref[...].astype(jnp.float32)                       # (B, N, D)

    acc = jnp.zeros((B, N, DIM), jnp.float32)
    for h in range(HEADS):                                    # static unroll over heads
        # per-head projections: leading-axis weight indexing (no lane slicing)
        q = jnp.einsum('bnd,dc->bnc', x, wq_ref[h],
                       preferred_element_type=jnp.float32)    # (B, N, Dh)
        k = jnp.einsum('bnd,dc->bnc', x, wk_ref[h],
                       preferred_element_type=jnp.float32)    # (B, N, Dh)
        v = jnp.einsum('bnd,dc->bnc', x, wv_ref[h],
                       preferred_element_type=jnp.float32)    # (B, N, Dh)

        dots = jnp.einsum('bqc,bkc->bqk', q, k,
                          preferred_element_type=jnp.float32) * SCALE   # (B, N, N)

        # numerically-stable softmax; reciprocal on the EUP (free slot)
        m = jnp.max(dots, axis=-1, keepdims=True)
        e = jnp.exp(dots - m)
        attn = e * pl.reciprocal(jnp.sum(e, axis=-1, keepdims=True), approx=True)

        hv = jnp.einsum('bqk,bkc->bqc', attn, v,
                        preferred_element_type=jnp.float32)   # (B, N, Dh)

        # fold the output projection in per head -> no concatenate / rearrange needed
        acc = acc + jnp.einsum('bnc,cd->bnd', hv, wo_ref[h],
                               preferred_element_type=jnp.float32)      # (B, N, D)

    o_ref[...] = (acc + bo_ref[...]).astype(o_ref.dtype)


# ---------------------------------------------------------------------------
# wrapper
# ---------------------------------------------------------------------------
def attention_forward(x, w_qkv, w_out, b_out):
    """x: (B, N, D); w_qkv: (D, 3*INNER); w_out: (INNER, D); b_out: (1, D).

    Weights are in x @ W layout (transpose of PyTorch's nn.Linear storage).
    Per-head reshapes are done once here in plain XLA so the kernel only does
    leading-axis indexing.
    """
    bsz, n, d = x.shape
    wq, wk, wv = jnp.split(w_qkv, 3, axis=1)                           # each (D, INNER)
    to_heads = lambda w: w.reshape(d, HEADS, DIM_HEAD).transpose(1, 0, 2)  # (H, D, Dh)
    wq, wk, wv = to_heads(wq), to_heads(wk), to_heads(wv)
    wo = w_out.reshape(HEADS, DIM_HEAD, d)                             # (H, Dh, D)

    return pl.pallas_call(
        attention_kernel,
        out_shape=jax.ShapeDtypeStruct(x.shape, x.dtype),
    )(x, wq, wk, wv, wo, b_out)


# ---------------------------------------------------------------------------
# pure-JAX reference (mirrors the PyTorch forward) for a sanity check
# ---------------------------------------------------------------------------
def attention_reference(x, w_qkv, w_out, b_out):
    bsz, n, d = x.shape
    qkv = x @ w_qkv                                                    # (B, N, 3*INNER)
    q, k, v = jnp.split(qkv, 3, axis=-1)
    heads = lambda t: t.reshape(bsz, n, HEADS, DIM_HEAD).transpose(0, 2, 1, 3)
    q, k, v = heads(q), heads(k), heads(v)                             # (B, H, N, Dh)
    dots = jnp.einsum('bhqc,bhkc->bhqk', q, k) * SCALE
    attn = jax.nn.softmax(dots, axis=-1)
    out = jnp.einsum('bhqk,bhkc->bhqc', attn, v)
    out = out.transpose(0, 2, 1, 3).reshape(bsz, n, INNER)             # 'b h n d -> b n (h d)'
    return out @ w_out + b_out


if __name__ == "__main__":
    key = jax.random.PRNGKey(0)
    kx, k0, k1, k2 = jax.random.split(key, 4)

    x = jax.random.normal(kx, (B, N, DIM), jnp.float32)
    w_qkv = 0.02 * jax.random.normal(k0, (DIM, 3 * INNER), jnp.float32)   # to_qkv (no bias)
    w_out = 0.02 * jax.random.normal(k1, (INNER, DIM), jnp.float32)       # to_out Linear weight
    b_out = 0.02 * jax.random.normal(k2, (1, DIM), jnp.float32)           # to_out Linear bias

    y = attention_forward(x, w_qkv, w_out, b_out)
    jax.block_until_ready(y)

    assert y.shape == (B, N, DIM) and y.dtype == jnp.float32
    assert bool(jnp.all(jnp.isfinite(y)))

    y_ref = attention_reference(x, w_qkv, w_out, b_out)
    max_err = float(jnp.max(jnp.abs(y - y_ref)))
    assert max_err < 1e-2, f"mismatch vs reference: {max_err}"

    print("KERNEL_OK")
</pallas_src>

<mosaic_0001>
module attributes {stable_mosaic.version = 11 : i64} {
  func.func @attention_kernel(%arg0: memref<2x8x32xf32, #tpu.memory_space<vmem>>, %arg1: memref<4x32x8xf32, #tpu.memory_space<vmem>>, %arg2: memref<4x32x8xf32, #tpu.memory_space<vmem>>, %arg3: memref<4x32x8xf32, #tpu.memory_space<vmem>>, %arg4: memref<4x8x32xf32, #tpu.memory_space<vmem>>, %arg5: memref<1x32xf32, #tpu.memory_space<vmem>>, %arg6: memref<2x8x32xf32, #tpu.memory_space<vmem>>) attributes {dimension_semantics = [], scalar_prefetch = 0 : i64, scratch_operands = 0 : i64, tpu.core_type = #tpu.core_type<tc>} {
    %c0 = arith.constant 0 : index
    %c0_0 = arith.constant 0 : index
    %c0_1 = arith.constant 0 : index
    %0 = vector.load %arg0[%c0, %c0_0, %c0_1] : memref<2x8x32xf32, #tpu.memory_space<vmem>>, vector<2x8x32xf32>
    %cst = arith.constant 0.000000e+00 : f32
    %1 = vector.broadcast %cst : f32 to vector<2x8x32xf32>
    %c0_2 = arith.constant 0 : index
    %c0_3 = arith.constant 0 : index
    %c0_4 = arith.constant 0 : index
    %2 = vector.load %arg1[%c0_2, %c0_3, %c0_4] : memref<4x32x8xf32, #tpu.memory_space<vmem>>, vector<1x32x8xf32>
    %3 = vector.shape_cast %2 : vector<1x32x8xf32> to vector<32x8xf32>
    "tpu.trace_start"() <{level = 10 : i32, message = "bnd,dc->bnc"}> : () -> ()
    %cst_5 = arith.constant dense<0.000000e+00> : vector<2x8x8xf32>
    %4 = tpu.matmul %0, %3, %cst_5 {dimension_numbers = #tpu.dot_dimension_numbers<[2], [0], [0, 1], [1], [0, 0, 0, 1, 1, 1], [], []>} : vector<2x8x32xf32>, vector<32x8xf32>, vector<2x8x8xf32> -> vector<2x8x8xf32>
    "tpu.trace_stop"() : () -> ()
    %c0_6 = arith.constant 0 : index
    %c0_7 = arith.constant 0 : index
    %c0_8 = arith.constant 0 : index
    %5 = vector.load %arg2[%c0_6, %c0_7, %c0_8] : memref<4x32x8xf32, #tpu.memory_space<vmem>>, vector<1x32x8xf32>
    %6 = vector.shape_cast %5 : vector<1x32x8xf32> to vector<32x8xf32>
    "tpu.trace_start"() <{level = 10 : i32, message = "bnd,dc->bnc"}> : () -> ()
    %cst_9 = arith.constant dense<0.000000e+00> : vector<2x8x8xf32>
    %7 = tpu.matmul %0, %6, %cst_9 {dimension_numbers = #tpu.dot_dimension_numbers<[2], [0], [0, 1], [1], [0, 0, 0, 1, 1, 1], [], []>} : vector<2x8x32xf32>, vector<32x8xf32>, vector<2x8x8xf32> -> vector<2x8x8xf32>
    "tpu.trace_stop"() : () -> ()
    %c0_10 = arith.constant 0 : index
    %c0_11 = arith.constant 0 : index
    %c0_12 = arith.constant 0 : index
    %8 = vector.load %arg3[%c0_10, %c0_11, %c0_12] : memref<4x32x8xf32, #tpu.memory_space<vmem>>, vector<1x32x8xf32>
    %9 = vector.shape_cast %8 : vector<1x32x8xf32> to vector<32x8xf32>
    "tpu.trace_start"() <{level = 10 : i32, message = "bnd,dc->bnc"}> : () -> ()
    %cst_13 = arith.constant dense<0.000000e+00> : vector<2x8x8xf32>
    %10 = tpu.matmul %0, %9, %cst_13 {dimension_numbers = #tpu.dot_dimension_numbers<[2], [0], [0, 1], [1], [0, 0, 0, 1, 1, 1], [], []>} : vector<2x8x32xf32>, vector<32x8xf32>, vector<2x8x8xf32> -> vector<2x8x8xf32>
    "tpu.trace_stop"() : () -> ()
    "tpu.trace_start"() <{level = 10 : i32, message = "bqc,bkc->bqk"}> : () -> ()
    %cst_14 = arith.constant dense<0.000000e+00> : vector<2x8x8xf32>
    %11 = tpu.matmul %4, %7, %cst_14 {dimension_numbers = #tpu.dot_dimension_numbers<[2], [2], [1], [1], [0, 0, 0, 1, 1, 1], [0], [0]>} : vector<2x8x8xf32>, vector<2x8x8xf32>, vector<2x8x8xf32> -> vector<2x8x8xf32>
    "tpu.trace_stop"() : () -> ()
    %cst_15 = arith.constant 0.353553385 : f32
    %12 = vector.broadcast %cst_15 : f32 to vector<2x8x8xf32>
    %13 = arith.mulf %11, %12 : vector<2x8x8xf32>
    %cst_16 = arith.constant dense<0xFF800000> : vector<2x8xf32>
    %14 = vector.multi_reduction <maximumf>, %13, %cst_16 [2] : vector<2x8x8xf32> to vector<2x8xf32>
    %15 = vector.shape_cast %14 : vector<2x8xf32> to vector<2x8x1xf32>
    %16 = vector.broadcast %15 : vector<2x8x1xf32> to vector<2x8x8xf32>
    %17 = arith.subf %13, %16 : vector<2x8x8xf32>
    %18 = math.exp %17 : vector<2x8x8xf32>
    %cst_17 = arith.constant dense<0.000000e+00> : vector<2x8xf32>
    %19 = vector.multi_reduction <add>, %18, %cst_17 [2] : vector<2x8x8xf32> to vector<2x8xf32>
    %20 = vector.shape_cast %19 : vector<2x8xf32> to vector<2x8x1xf32>
    %21 = tpu.reciprocal %20 {approx = true} : vector<2x8x1xf32> -> vector<2x8x1xf32>
    %22 = vector.broadcast %21 : vector<2x8x1xf32> to vector<2x8x8xf32>
    %23 = arith.mulf %18, %22 : vector<2x8x8xf32>
    "tpu.trace_start"() <{level = 10 : i32, message = "bqk,bkc->bqc"}> : () -> ()
    %cst_18 = arith.constant dense<0.000000e+00> : vector<2x8x8xf32>
    %24 = tpu.matmul %23, %10, %cst_18 {dimension_numbers = #tpu.dot_dimension_numbers<[2], [1], [1], [2], [0, 0, 0, 1, 1, 2], [0], [0]>} : vector<2x8x8xf32>, vector<2x8x8xf32>, vector<2x8x8xf32> -> vector<2x8x8xf32>
    "tpu.trace_stop"() : () -> ()
    %c0_19 = arith.constant 0 : index
    %c0_20 = arith.constant 0 : index
    %c0_21 = arith.constant 0 : index
    %25 = vector.load %arg4[%c0_19, %c0_20, %c0_21] : memref<4x8x32xf32, #tpu.memory_space<vmem>>, vector<1x8x32xf32>
    %26 = vector.shape_cast %25 : vector<1x8x32xf32> to vector<8x32xf32>
    "tpu.trace_start"() <{level = 10 : i32, message = "bnc,cd->bnd"}> : () -> ()
    %cst_22 = arith.constant dense<0.000000e+00> : vector<2x8x32xf32>
    %27 = tpu.matmul %24, %26, %cst_22 {dimension_numbers = #tpu.dot_dimension_numbers<[2], [0], [0, 1], [1], [0, 0, 0, 1, 1, 1], [], []>} : vector<2x8x8xf32>, vector<8x32xf32>, vector<2x8x32xf32> -> vector<2x8x32xf32>
    "tpu.trace_stop"() : () -> ()
    %28 = arith.addf %1, %27 : vector<2x8x32xf32>
    %c1 = arith.constant 1 : index
    %c0_23 = arith.constant 0 : index
    %c0_24 = arith.constant 0 : index
    %29 = vector.load %arg1[%c1, %c0_23, %c0_24] : memref<4x32x8xf32, #tpu.memory_space<vmem>>, vector<1x32x8xf32>
    %30 = vector.shape_cast %29 : vector<1x32x8xf32> to vector<32x8xf32>
    "tpu.trace_start"() <{level = 10 : i32, message = "bnd,dc->bnc"}> : () -> ()
    %cst_25 = arith.constant dense<0.000000e+00> : vector<2x8x8xf32>
    %31 = tpu.matmul %0, %30, %cst_25 {dimension_numbers = #tpu.dot_dimension_numbers<[2], [0], [0, 1], [1], [0, 0, 0, 1, 1, 1], [], []>} : vector<2x8x32xf32>, vector<32x8xf32>, vector<2x8x8xf32> -> vector<2x8x8xf32>
    "tpu.trace_stop"() : () -> ()
    %c1_26 = arith.constant 1 : index
    %c0_27 = arith.constant 0 : index
    %c0_28 = arith.constant 0 : index
    %32 = vector.load %arg2[%c1_26, %c0_27, %c0_28] : memref<4x32x8xf32, #tpu.memory_space<vmem>>, vector<1x32x8xf32>
    %33 = vector.shape_cast %32 : vector<1x32x8xf32> to vector<32x8xf32>
    "tpu.trace_start"() <{level = 10 : i32, message = "bnd,dc->bnc"}> : () -> ()
    %cst_29 = arith.constant dense<0.000000e+00> : vector<2x8x8xf32>
    %34 = tpu.matmul %0, %33, %cst_29 {dimension_numbers = #tpu.dot_dimension_numbers<[2], [0], [0, 1], [1], [0, 0, 0, 1, 1, 1], [], []>} : vector<2x8x32xf32>, vector<32x8xf32>, vector<2x8x8xf32> -> vector<2x8x8xf32>
    "tpu.trace_stop"() : () -> ()
    %c1_30 = arith.constant 1 : index
    %c0_31 = arith.constant 0 : index
    %c0_32 = arith.constant 0 : index
    %35 = vector.load %arg3[%c1_30, %c0_31, %c0_32] : memref<4x32x8xf32, #tpu.memory_space<vmem>>, vector<1x32x8xf32>
    %36 = vector.shape_cast %35 : vector<1x32x8xf32> to vector<32x8xf32>
    "tpu.trace_start"() <{level = 10 : i32, message = "bnd,dc->bnc"}> : () -> ()
    %cst_33 = arith.constant dense<0.000000e+00> : vector<2x8x8xf32>
    %37 = tpu.matmul %0, %36, %cst_33 {dimension_numbers = #tpu.dot_dimension_numbers<[2], [0], [0, 1], [1], [0, 0, 0, 1, 1, 1], [], []>} : vector<2x8x32xf32>, vector<32x8xf32>, vector<2x8x8xf32> -> vector<2x8x8xf32>
    "tpu.trace_stop"() : () -> ()
    "tpu.trace_start"() <{level = 10 : i32, message = "bqc,bkc->bqk"}> : () -> ()
    %cst_34 = arith.constant dense<0.000000e+00> : vector<2x8x8xf32>
    %38 = tpu.matmul %31, %34, %cst_34 {dimension_numbers = #tpu.dot_dimension_numbers<[2], [2], [1], [1], [0, 0, 0, 1, 1, 1], [0], [0]>} : vector<2x8x8xf32>, vector<2x8x8xf32>, vector<2x8x8xf32> -> vector<2x8x8xf32>
    "tpu.trace_stop"() : () -> ()
    %cst_35 = arith.constant 0.353553385 : f32
    %39 = vector.broadcast %cst_35 : f32 to vector<2x8x8xf32>
    %40 = arith.mulf %38, %39 : vector<2x8x8xf32>
    %cst_36 = arith.constant dense<0xFF800000> : vector<2x8xf32>
    %41 = vector.multi_reduction <maximumf>, %40, %cst_36 [2] : vector<2x8x8xf32> to vector<2x8xf32>
    %42 = vector.shape_cast %41 : vector<2x8xf32> to vector<2x8x1xf32>
    %43 = vector.broadcast %42 : vector<2x8x1xf32> to vector<2x8x8xf32>
    %44 = arith.subf %40, %43 : vector<2x8x8xf32>
    %45 = math.exp %44 : vector<2x8x8xf32>
    %cst_37 = arith.constant dense<0.000000e+00> : vector<2x8xf32>
    %46 = vector.multi_reduction <add>, %45, %cst_37 [2] : vector<2x8x8xf32> to vector<2x8xf32>
    %47 = vector.shape_cast %46 : vector<2x8xf32> to vector<2x8x1xf32>
    %48 = tpu.reciprocal %47 {approx = true} : vector<2x8x1xf32> -> vector<2x8x1xf32>
    %49 = vector.broadcast %48 : vector<2x8x1xf32> to vector<2x8x8xf32>
    %50 = arith.mulf %45, %49 : vector<2x8x8xf32>
    "tpu.trace_start"() <{level = 10 : i32, message = "bqk,bkc->bqc"}> : () -> ()
    %cst_38 = arith.constant dense<0.000000e+00> : vector<2x8x8xf32>
    %51 = tpu.matmul %50, %37, %cst_38 {dimension_numbers = #tpu.dot_dimension_numbers<[2], [1], [1], [2], [0, 0, 0, 1, 1, 2], [0], [0]>} : vector<2x8x8xf32>, vector<2x8x8xf32>, vector<2x8x8xf32> -> vector<2x8x8xf32>
    "tpu.trace_stop"() : () -> ()
    %c1_39 = arith.constant 1 : index
    %c0_40 = arith.constant 0 : index
    %c0_41 = arith.constant 0 : index
    %52 = vector.load %arg4[%c1_39, %c0_40, %c0_41] : memref<4x8x32xf32, #tpu.memory_space<vmem>>, vector<1x8x32xf32>
    %53 = vector.shape_cast %52 : vector<1x8x32xf32> to vector<8x32xf32>
    "tpu.trace_start"() <{level = 10 : i32, message = "bnc,cd->bnd"}> : () -> ()
    %cst_42 = arith.constant dense<0.000000e+00> : vector<2x8x32xf32>
    %54 = tpu.matmul %51, %53, %cst_42 {dimension_numbers = #tpu.dot_dimension_numbers<[2], [0], [0, 1], [1], [0, 0, 0, 1, 1, 1], [], []>} : vector<2x8x8xf32>, vector<8x32xf32>, vector<2x8x32xf32> -> vector<2x8x32xf32>
    "tpu.trace_stop"() : () -> ()
    %55 = arith.addf %28, %54 : vector<2x8x32xf32>
    %c2 = arith.constant 2 : index
    %c0_43 = arith.constant 0 : index
    %c0_44 = arith.constant 0 : index
    %56 = vector.load %arg1[%c2, %c0_43, %c0_44] : memref<4x32x8xf32, #tpu.memory_space<vmem>>, vector<1x32x8xf32>
    %57 = vector.shape_cast %56 : vector<1x32x8xf32> to vector<32x8xf32>
    "tpu.trace_start"() <{level = 10 : i32, message = "bnd,dc->bnc"}> : () -> ()
    %cst_45 = arith.constant dense<0.000000e+00> : vector<2x8x8xf32>
    %58 = tpu.matmul %0, %57, %cst_45 {dimension_numbers = #tpu.dot_dimension_numbers<[2], [0], [0, 1], [1], [0, 0, 0, 1, 1, 1], [], []>} : vector<2x8x32xf32>, vector<32x8xf32>, vector<2x8x8xf32> -> vector<2x8x8xf32>
    "tpu.trace_stop"() : () -> ()
    %c2_46 = arith.constant 2 : index
    %c0_47 = arith.constant 0 : index
    %c0_48 = arith.constant 0 : index
    %59 = vector.load %arg2[%c2_46, %c0_47, %c0_48] : memref<4x32x8xf32, #tpu.memory_space<vmem>>, vector<1x32x8xf32>
    %60 = vector.shape_cast %59 : vector<1x32x8xf32> to vector<32x8xf32>
    "tpu.trace_start"() <{level = 10 : i32, message = "bnd,dc->bnc"}> : () -> ()
    %cst_49 = arith.constant dense<0.000000e+00> : vector<2x8x8xf32>
    %61 = tpu.matmul %0, %60, %cst_49 {dimension_numbers = #tpu.dot_dimension_numbers<[2], [0], [0, 1], [1], [0, 0, 0, 1, 1, 1], [], []>} : vector<2x8x32xf32>, vector<32x8xf32>, vector<2x8x8xf32> -> vector<2x8x8xf32>
    "tpu.trace_stop"() : () -> ()
    %c2_50 = arith.constant 2 : index
    %c0_51 = arith.constant 0 : index
    %c0_52 = arith.constant 0 : index
    %62 = vector.load %arg3[%c2_50, %c0_51, %c0_52] : memref<4x32x8xf32, #tpu.memory_space<vmem>>, vector<1x32x8xf32>
    %63 = vector.shape_cast %62 : vector<1x32x8xf32> to vector<32x8xf32>
    "tpu.trace_start"() <{level = 10 : i32, message = "bnd,dc->bnc"}> : () -> ()
    %cst_53 = arith.constant dense<0.000000e+00> : vector<2x8x8xf32>
    %64 = tpu.matmul %0, %63, %cst_53 {dimension_numbers = #tpu.dot_dimension_numbers<[2], [0], [0, 1], [1], [0, 0, 0, 1, 1, 1], [], []>} : vector<2x8x32xf32>, vector<32x8xf32>, vector<2x8x8xf32> -> vector<2x8x8xf32>
    "tpu.trace_stop"() : () -> ()
    "tpu.trace_start"() <{level = 10 : i32, message = "bqc,bkc->bqk"}> : () -> ()
    %cst_54 = arith.constant dense<0.000000e+00> : vector<2x8x8xf32>
    %65 = tpu.matmul %58, %61, %cst_54 {dimension_numbers = #tpu.dot_dimension_numbers<[2], [2], [1], [1], [0, 0, 0, 1, 1, 1], [0], [0]>} : vector<2x8x8xf32>, vector<2x8x8xf32>, vector<2x8x8xf32> -> vector<2x8x8xf32>
    "tpu.trace_stop"() : () -> ()
    %cst_55 = arith.constant 0.353553385 : f32
    %66 = vector.broadcast %cst_55 : f32 to vector<2x8x8xf32>
    %67 = arith.mulf %65, %66 : vector<2x8x8xf32>
    %cst_56 = arith.constant dense<0xFF800000> : vector<2x8xf32>
    %68 = vector.multi_reduction <maximumf>, %67, %cst_56 [2] : vector<2x8x8xf32> to vector<2x8xf32>
    %69 = vector.shape_cast %68 : vector<2x8xf32> to vector<2x8x1xf32>
    %70 = vector.broadcast %69 : vector<2x8x1xf32> to vector<2x8x8xf32>
    %71 = arith.subf %67, %70 : vector<2x8x8xf32>
    %72 = math.exp %71 : vector<2x8x8xf32>
    %cst_57 = arith.constant dense<0.000000e+00> : vector<2x8xf32>
    %73 = vector.multi_reduction <add>, %72, %cst_57 [2] : vector<2x8x8xf32> to vector<2x8xf32>
    %74 = vector.shape_cast %73 : vector<2x8xf32> to vector<2x8x1xf32>
    %75 = tpu.reciprocal %74 {approx = true} : vector<2x8x1xf32> -> vector<2x8x1xf32>
    %76 = vector.broadcast %75 : vector<2x8x1xf32> to vector<2x8x8xf32>
    %77 = arith.mulf %72, %76 : vector<2x8x8xf32>
    "tpu.trace_start"() <{level = 10 : i32, message = "bqk,bkc->bqc"}> : () -> ()
    %cst_58 = arith.constant dense<0.000000e+00> : vector<2x8x8xf32>
    %78 = tpu.matmul %77, %64, %cst_58 {dimension_numbers = #tpu.dot_dimension_numbers<[2], [1], [1], [2], [0, 0, 0, 1, 1, 2], [0], [0]>} : vector<2x8x8xf32>, vector<2x8x8xf32>, vector<2x8x8xf32> -> vector<2x8x8xf32>
    "tpu.trace_stop"() : () -> ()
    %c2_59 = arith.constant 2 : index
    %c0_60 = arith.constant 0 : index
    %c0_61 = arith.constant 0 : index
    %79 = vector.load %arg4[%c2_59, %c0_60, %c0_61] : memref<4x8x32xf32, #tpu.memory_space<vmem>>, vector<1x8x32xf32>
    %80 = vector.shape_cast %79 : vector<1x8x32xf32> to vector<8x32xf32>
    "tpu.trace_start"() <{level = 10 : i32, message = "bnc,cd->bnd"}> : () -> ()
    %cst_62 = arith.constant dense<0.000000e+00> : vector<2x8x32xf32>
    %81 = tpu.matmul %78, %80, %cst_62 {dimension_numbers = #tpu.dot_dimension_numbers<[2], [0], [0, 1], [1], [0, 0, 0, 1, 1, 1], [], []>} : vector<2x8x8xf32>, vector<8x32xf32>, vector<2x8x32xf32> -> vector<2x8x32xf32>
    "tpu.trace_stop"() : () -> ()
    %82 = arith.addf %55, %81 : vector<2x8x32xf32>
    %c3 = arith.constant 3 : index
    %c0_63 = arith.constant 0 : index
    %c0_64 = arith.constant 0 : index
    %83 = vector.load %arg1[%c3, %c0_63, %c0_64] : memref<4x32x8xf32, #tpu.memory_space<vmem>>, vector<1x32x8xf32>
    %84 = vector.shape_cast %83 : vector<1x32x8xf32> to vector<32x8xf32>
    "tpu.trace_start"() <{level = 10 : i32, message = "bnd,dc->bnc"}> : () -> ()
    %cst_65 = arith.constant dense<0.000000e+00> : vector<2x8x8xf32>
    %85 = tpu.matmul %0, %84, %cst_65 {dimension_numbers = #tpu.dot_dimension_numbers<[2], [0], [0, 1], [1], [0, 0, 0, 1, 1, 1], [], []>} : vector<2x8x32xf32>, vector<32x8xf32>, vector<2x8x8xf32> -> vector<2x8x8xf32>
    "tpu.trace_stop"() : () -> ()
    %c3_66 = arith.constant 3 : index
    %c0_67 = arith.constant 0 : index
    %c0_68 = arith.constant 0 : index
    %86 = vector.load %arg2[%c3_66, %c0_67, %c0_68] : memref<4x32x8xf32, #tpu.memory_space<vmem>>, vector<1x32x8xf32>
    %87 = vector.shape_cast %86 : vector<1x32x8xf32> to vector<32x8xf32>
    "tpu.trace_start"() <{level = 10 : i32, message = "bnd,dc->bnc"}> : () -> ()
    %cst_69 = arith.constant dense<0.000000e+00> : vector<2x8x8xf32>
    %88 = tpu.matmul %0, %87, %cst_69 {dimension_numbers = #tpu.dot_dimension_numbers<[2], [0], [0, 1], [1], [0, 0, 0, 1, 1, 1], [], []>} : vector<2x8x32xf32>, vector<32x8xf32>, vector<2x8x8xf32> -> vector<2x8x8xf32>
    "tpu.trace_stop"() : () -> ()
    %c3_70 = arith.constant 3 : index
    %c0_71 = arith.constant 0 : index
    %c0_72 = arith.constant 0 : index
    %89 = vector.load %arg3[%c3_70, %c0_71, %c0_72] : memref<4x32x8xf32, #tpu.memory_space<vmem>>, vector<1x32x8xf32>
    %90 = vector.shape_cast %89 : vector<1x32x8xf32> to vector<32x8xf32>
    "tpu.trace_start"() <{level = 10 : i32, message = "bnd,dc->bnc"}> : () -> ()
    %cst_73 = arith.constant dense<0.000000e+00> : vector<2x8x8xf32>
    %91 = tpu.matmul %0, %90, %cst_73 {dimension_numbers = #tpu.dot_dimension_numbers<[2], [0], [0, 1], [1], [0, 0, 0, 1, 1, 1], [], []>} : vector<2x8x32xf32>, vector<32x8xf32>, vector<2x8x8xf32> -> vector<2x8x8xf32>
    "tpu.trace_stop"() : () -> ()
    "tpu.trace_start"() <{level = 10 : i32, message = "bqc,bkc->bqk"}> : () -> ()
    %cst_74 = arith.constant dense<0.000000e+00> : vector<2x8x8xf32>
    %92 = tpu.matmul %85, %88, %cst_74 {dimension_numbers = #tpu.dot_dimension_numbers<[2], [2], [1], [1], [0, 0, 0, 1, 1, 1], [0], [0]>} : vector<2x8x8xf32>, vector<2x8x8xf32>, vector<2x8x8xf32> -> vector<2x8x8xf32>
    "tpu.trace_stop"() : () -> ()
    %cst_75 = arith.constant 0.353553385 : f32
    %93 = vector.broadcast %cst_75 : f32 to vector<2x8x8xf32>
    %94 = arith.mulf %92, %93 : vector<2x8x8xf32>
    %cst_76 = arith.constant dense<0xFF800000> : vector<2x8xf32>
    %95 = vector.multi_reduction <maximumf>, %94, %cst_76 [2] : vector<2x8x8xf32> to vector<2x8xf32>
    %96 = vector.shape_cast %95 : vector<2x8xf32> to vector<2x8x1xf32>
    %97 = vector.broadcast %96 : vector<2x8x1xf32> to vector<2x8x8xf32>
    %98 = arith.subf %94, %97 : vector<2x8x8xf32>
    %99 = math.exp %98 : vector<2x8x8xf32>
    %cst_77 = arith.constant dense<0.000000e+00> : vector<2x8xf32>
    %100 = vector.multi_reduction <add>, %99, %cst_77 [2] : vector<2x8x8xf32> to vector<2x8xf32>
    %101 = vector.shape_cast %100 : vector<2x8xf32> to vector<2x8x1xf32>
    %102 = tpu.reciprocal %101 {approx = true} : vector<2x8x1xf32> -> vector<2x8x1xf32>
    %103 = vector.broadcast %102 : vector<2x8x1xf32> to vector<2x8x8xf32>
    %104 = arith.mulf %99, %103 : vector<2x8x8xf32>
    "tpu.trace_start"() <{level = 10 : i32, message = "bqk,bkc->bqc"}> : () -> ()
    %cst_78 = arith.constant dense<0.000000e+00> : vector<2x8x8xf32>
    %105 = tpu.matmul %104, %91, %cst_78 {dimension_numbers = #tpu.dot_dimension_numbers<[2], [1], [1], [2], [0, 0, 0, 1, 1, 2], [0], [0]>} : vector<2x8x8xf32>, vector<2x8x8xf32>, vector<2x8x8xf32> -> vector<2x8x8xf32>
    "tpu.trace_stop"() : () -> ()
    %c3_79 = arith.constant 3 : index
    %c0_80 = arith.constant 0 : index
    %c0_81 = arith.constant 0 : index
    %106 = vector.load %arg4[%c3_79, %c0_80, %c0_81] : memref<4x8x32xf32, #tpu.memory_space<vmem>>, vector<1x8x32xf32>
    %107 = vector.shape_cast %106 : vector<1x8x32xf32> to vector<8x32xf32>
    "tpu.trace_start"() <{level = 10 : i32, message = "bnc,cd->bnd"}> : () -> ()
    %cst_82 = arith.constant dense<0.000000e+00> : vector<2x8x32xf32>
    %108 = tpu.matmul %105, %107, %cst_82 {dimension_numbers = #tpu.dot_dimension_numbers<[2], [0], [0, 1], [1], [0, 0, 0, 1, 1, 1], [], []>} : vector<2x8x8xf32>, vector<8x32xf32>, vector<2x8x32xf32> -> vector<2x8x32xf32>
    "tpu.trace_stop"() : () -> ()
    %109 = arith.addf %82, %108 : vector<2x8x32xf32>
    %c0_83 = arith.constant 0 : index
    %c0_84 = arith.constant 0 : index
    %110 = vector.load %arg5[%c0_83, %c0_84] : memref<1x32xf32, #tpu.memory_space<vmem>>, vector<1x32xf32>
    %111 = vector.shape_cast %110 : vector<1x32xf32> to vector<1x1x32xf32>
    %112 = vector.broadcast %111 : vector<1x1x32xf32> to vector<2x8x32xf32>
    %113 = arith.addf %109, %112 : vector<2x8x32xf32>
    %c0_85 = arith.constant 0 : index
    %c0_86 = arith.constant 0 : index
    %c0_87 = arith.constant 0 : index
    %114 = vector.load %arg6[%c0_85, %c0_86, %c0_87] : memref<2x8x32xf32, #tpu.memory_space<vmem>>, vector<2x8x32xf32>
    tpu.vector_store %arg6[%c0_85, %c0_86, %c0_87], %113 {strides = array<i32>} : memref<2x8x32xf32, #tpu.memory_space<vmem>>, vector<2x8x32xf32>,
    return
  }
}

</mosaic_0001>

<llo_original>
// kernel: tpu_custom_call.1
$region0: #{tpu_custom_call.1}
  #allocation0 [shape = 'u32[]', space=smem, size = 0x4, offset = 0x4, fixed_abs, tag = 'smem constant byte address 0x4 - core index']
  #allocation1 [shape = 'u32[144,128]{1,0:T(1,128)}', space=vmem, size = 0x12000, scoped, tag = 'internal scratch']
  %s0 = inlined_call_operand.vmem [shape: f32[2,8,32], index: 0, kind: input, shape index: {}]
  %s1 = inlined_call_operand.vmem [shape: f32[4,32,8], index: 1, kind: input, shape index: {}]
  %s2 = inlined_call_operand.vmem [shape: f32[4,32,8], index: 2, kind: input, shape index: {}]
  %s3 = inlined_call_operand.vmem [shape: f32[4,32,8], index: 3, kind: input, shape index: {}]
  %s4 = inlined_call_operand.vmem [shape: f32[4,8,32], index: 4, kind: input, shape index: {}]
  %s5 = inlined_call_operand.vmem [shape: f32[1,32], index: 5, kind: input, shape index: {}]
  %s6 = inlined_call_operand.hbm [shape: f32[2,8,32], index: 6, kind: output, shape index: {}]
  %s7 = sld [smem:[#allocation0]]
  $region34: #{tpu_custom_call.1} parent=0
    _
  %s9 = ssub.s32 1, %s7
  %s10 = scalar_select 0, %s9, %s7
  $region1: #{tpu_custom_call.1} parent=0
    #allocation2 [shape = 'u8[8192]{0}', space=vmem, size = 0x2000, scoped, tag = 'output window, operand 0, single buffered']
    #allocation3 [shape = 's32[1]{0}', space=sflag, size = 0x4, scoped, tag = 'scoped memory for tpu_custom_call.1']
    %11 = vsyncpa [#allocation3], 0
    // Predicated region
    $region2: #{tpu_custom_call.1} parent=1 // pred_check
      _
    $region3: #{tpu_custom_call.1} parent=1 // pred_check_branch
      %13 = sbr.rel (0) target = $region5
    $region4: #{tpu_custom_call.1} parent=1 // pred_region
      _
    $region5: #{tpu_custom_call.1} parent=1 // pred_fallthru
      _
    // Predicated region
    $region6: #{tpu_custom_call.1} parent=1 // pred_check
      _
    $region7: #{tpu_custom_call.1} parent=1 // pred_check_branch
      %15 = sbr.rel (0) target = $region9
    $region8: #{tpu_custom_call.1} parent=1 // pred_region
      _
    $region9: #{tpu_custom_call.1} parent=1 // pred_fallthru
      _
    // Predicated region
    $region10: #{tpu_custom_call.1} parent=1 // pred_check
      _
    $region11: #{tpu_custom_call.1} parent=1 // pred_check_branch
      %17 = sbr.rel (0) target = $region13
    $region12: #{tpu_custom_call.1} parent=1 // pred_region
      _
    $region13: #{tpu_custom_call.1} parent=1 // pred_fallthru
      _
    // Predicated region
    $region14: #{tpu_custom_call.1} parent=1 // pred_check
      _
    $region15: #{tpu_custom_call.1} parent=1 // pred_check_branch
      %19 = sbr.rel (0) target = $region17
    $region16: #{tpu_custom_call.1} parent=1 // pred_region
      _
    $region17: #{tpu_custom_call.1} parent=1 // pred_fallthru
      _
    // Predicated region
    $region18: #{tpu_custom_call.1} parent=1 // pred_check
      _
    $region19: #{tpu_custom_call.1} parent=1 // pred_check_branch
      %21 = sbr.rel (0) target = $region21
    $region20: #{tpu_custom_call.1} parent=1 // pred_region
      _
    $region21: #{tpu_custom_call.1} parent=1 // pred_fallthru
      _
    // Predicated region
    $region22: #{tpu_custom_call.1} parent=1 // pred_check
      _
    $region23: #{tpu_custom_call.1} parent=1 // pred_check_branch
      %23 = sbr.rel (0) target = $region25
    $region24: #{tpu_custom_call.1} parent=1 // pred_region
      _
    $region25: #{tpu_custom_call.1} parent=1 // pred_fallthru
      _
    %v24 = vld [vmem:[%s0] sm:$0xff]
    %v25 = vld [vmem:[%s0 + $0x8] sm:$0xff]
    %v26 = vld [vmem:[%s1] sm:$0xff]
    %v27 = vld [vmem:[%s1 + $0x8] sm:$0xff]
    %v28 = vld [vmem:[%s1 + $0x10] sm:$0xff]
    %v29 = vld [vmem:[%s1 + $0x18] sm:$0xff]
    %vm30 = vcmask 261120
    %v32 = vsel %vm30, %v24, 0
    %v35 = vsel %vm30, %v25, 0
    %37 = vmatprep.subr.mxu0 0.0
    %38 = vmatpush1.msra.mxu0 %v26
    %39 = vmatprep.subr.mxu0 0.0
    %40 = vmatpush1.msra.mxu0 %v27
    %41 = vmatprep.subr.mxu0 0.0
    %42 = vmatpush1.msra.mxu0 %v28
    %43 = vmatprep.subr.mxu0 0.0
    %44 = vmatpush1.msra.mxu0 %v29
    %45 = vmatprep.subr.mxu0 0.0
    %46 = vmatpush1.msra.mxu0 0.0
    %47 = vmatprep.subr.mxu0 0.0
    %48 = vmatpush1.msra.mxu0 0.0
    %49 = vmatprep.subr.mxu0 0.0
    %50 = vmatpush1.msra.mxu0 0.0
    %51 = vmatprep.subr.mxu0 0.0
    %52 = vmatpush1.msra.mxu0 0.0
    %53 = vmatprep.subr.mxu0 0.0
    %54 = vmatpush1.msra.mxu0 0.0
    %55 = vmatprep.subr.mxu0 0.0
    %56 = vmatpush1.msra.mxu0 0.0
    %57 = vmatprep.subr.mxu0 0.0
    %58 = vmatpush1.msra.mxu0 0.0
    %59 = vmatprep.subr.mxu0 0.0
    %60 = vmatpush1.msra.mxu0 0.0
    %61 = vmatprep.subr.mxu0 0.0
    %62 = vmatpush1.msra.mxu0 0.0
    %63 = vmatprep.subr.mxu0 0.0
    %64 = vmatpush1.msra.mxu0 0.0
    %65 = vmatprep.subr.mxu0 0.0
    %66 = vmatpush1.msra.mxu0 0.0
    %67 = vmatprep.subr.mxu0 0.0
    %68 = vmatpush1.msra.mxu0 0.0
    %69 = vmatprep.subr.mxu0 0.0
    %70 = vmatpush1.msra.mxu0 0.0
    %71 = vmatprep.subr.mxu0 0.0
    %72 = vmatpush1.msra.mxu0 0.0
    %73 = vmatprep.subr.mxu0 0.0
    %74 = vmatpush1.msra.mxu0 0.0
    %75 = vmatprep.subr.mxu0 0.0
    %76 = vmatpush1.msra.mxu0 0.0
    %77 = vmatprep.subr.mxu0 0.0
    %78 = vmatpush1.msra.mxu0 0.0
    %79 = vmatprep.subr.mxu0 0.0
    %80 = vmatpush1.msra.mxu0 0.0
    %81 = vmatprep.subr.mxu0 0.0
    %82 = vmatpush1.msra.mxu0 0.0
    %83 = vmatprep.subr.mxu0 0.0
    %84 = vmatpush1.msra.mxu0 0.0
    %85 = vmatprep.subr.mxu0 0.0
    %86 = vmatpush1.msra.mxu0 0.0
    %87 = vmatprep.subr.mxu0 0.0
    %88 = vmatpush1.msra.mxu0 0.0
    %89 = vmatprep.subr.mxu0 0.0
    %90 = vmatpush1.msra.mxu0 0.0
    %91 = vmatprep.subr.mxu0 0.0
    %92 = vmatpush1.msra.mxu0 0.0
    %93 = vmatprep.subr.mxu0 0.0
    %94 = vmatpush1.msra.mxu0 0.0
    %95 = vmatprep.subr.mxu0 0.0
    %96 = vmatpush1.msra.mxu0 0.0
    %97 = vmatprep.subr.mxu0 0.0
    %98 = vmatpush1.msra.mxu0 0.0
    %99 = vmatprep.subr.mxu0 0.0
    %100 = vmatpush1.msra.mxu0 0.0
    %101 = vmatprep.mubr.f32.mxu0 0.0
    %102 = vmatmul.mubr.f32.gmra.mrb[0].mxu0 %v32
    %v103 = vpop.f32.mrb[0].mxu0
    %v104 = vadd.f32 0.0, %v103
    %v105 = vpop.f32.mrb[0].mxu0
    %106 = vmatprep.mubr.f32.mxu0 0.0
    %107 = vmatmul.mubr.f32.gmra.mrb[0].mxu0 %v35
    %v108 = vpop.f32.mrb[0].mxu0
    %v109 = vadd.f32 0.0, %v108
    %v110 = vpop.f32.mrb[0].mxu0
    %111 = vdwg.mxu0
    %v112 = vld [vmem:[%s2] sm:$0xff]
    %v113 = vld [vmem:[%s2 + $0x8] sm:$0xff]
    %v114 = vld [vmem:[%s2 + $0x10] sm:$0xff]
    %v115 = vld [vmem:[%s2 + $0x18] sm:$0xff]
    %116 = vmatprep.subr.mxu0 0.0
    %117 = vmatpush1.msra.mxu0 %v112
    %118 = vmatprep.subr.mxu0 0.0
    %119 = vmatpush1.msra.mxu0 %v113
    %120 = vmatprep.subr.mxu0 0.0
    %121 = vmatpush1.msra.mxu0 %v114
    %122 = vmatprep.subr.mxu0 0.0
    %123 = vmatpush1.msra.mxu0 %v115
    %124 = vmatprep.subr.mxu0 0.0
    %125 = vmatpush1.msra.mxu0 0.0
    %126 = vmatprep.subr.mxu0 0.0
    %127 = vmatpush1.msra.mxu0 0.0
    %128 = vmatprep.subr.mxu0 0.0
    %129 = vmatpush1.msra.mxu0 0.0
    %130 = vmatprep.subr.mxu0 0.0
    %131 = vmatpush1.msra.mxu0 0.0
    %132 = vmatprep.subr.mxu0 0.0
    %133 = vmatpush1.msra.mxu0 0.0
    %134 = vmatprep.subr.mxu0 0.0
    %135 = vmatpush1.msra.mxu0 0.0
    %136 = vmatprep.subr.mxu0 0.0
    %137 = vmatpush1.msra.mxu0 0.0
    %138 = vmatprep.subr.mxu0 0.0
    %139 = vmatpush1.msra.mxu0 0.0
    %140 = vmatprep.subr.mxu0 0.0
    %141 = vmatpush1.msra.mxu0 0.0
    %142 = vmatprep.subr.mxu0 0.0
    %143 = vmatpush1.msra.mxu0 0.0
    %144 = vmatprep.subr.mxu0 0.0
    %145 = vmatpush1.msra.mxu0 0.0
    %146 = vmatprep.subr.mxu0 0.0
    %147 = vmatpush1.msra.mxu0 0.0
    %148 = vmatprep.subr.mxu0 0.0
    %149 = vmatpush1.msra.mxu0 0.0
    %150 = vmatprep.subr.mxu0 0.0
    %151 = vmatpush1.msra.mxu0 0.0
    %152 = vmatprep.subr.mxu0 0.0
    %153 = vmatpush1.msra.mxu0 0.0
    %154 = vmatprep.subr.mxu0 0.0
    %155 = vmatpush1.msra.mxu0 0.0
    %156 = vmatprep.subr.mxu0 0.0
    %157 = vmatpush1.msra.mxu0 0.0
    %158 = vmatprep.subr.mxu0 0.0
    %159 = vmatpush1.msra.mxu0 0.0
    %160 = vmatprep.subr.mxu0 0.0
    %161 = vmatpush1.msra.mxu0 0.0
    %162 = vmatprep.subr.mxu0 0.0
    %163 = vmatpush1.msra.mxu0 0.0
    %164 = vmatprep.subr.mxu0 0.0
    %165 = vmatpush1.msra.mxu0 0.0
    %166 = vmatprep.subr.mxu0 0.0
    %167 = vmatpush1.msra.mxu0 0.0
    %168 = vmatprep.subr.mxu0 0.0
    %169 = vmatpush1.msra.mxu0 0.0
    %170 = vmatprep.subr.mxu0 0.0
    %171 = vmatpush1.msra.mxu0 0.0
    %172 = vmatprep.subr.mxu0 0.0
    %173 = vmatpush1.msra.mxu0 0.0
    %174 = vmatprep.subr.mxu0 0.0
    %175 = vmatpush1.msra.mxu0 0.0
    %176 = vmatprep.subr.mxu0 0.0
    %177 = vmatpush1.msra.mxu0 0.0
    %178 = vmatprep.subr.mxu0 0.0
    %179 = vmatpush1.msra.mxu0 0.0
    %180 = vmatprep.mubr.f32.mxu0 0.0
    %181 = vmatmul.mubr.f32.gmra.mrb[0].mxu0 %v32
    %v182 = vpop.f32.mrb[0].mxu0
    %v183 = vadd.f32 0.0, %v182
    %v184 = vpop.f32.mrb[0].mxu0
    %185 = vmatprep.mubr.f32.mxu0 0.0
    %186 = vmatmul.mubr.f32.gmra.mrb[0].mxu0 %v35
    %v187 = vpop.f32.mrb[0].mxu0
    %v188 = vadd.f32 0.0, %v187
    %v189 = vpop.f32.mrb[0].mxu0
    %190 = vdwg.mxu0
    %v191 = vld [vmem:[%s3] sm:$0xff]
    %v192 = vld [vmem:[%s3 + $0x8] sm:$0xff]
    %v193 = vld [vmem:[%s3 + $0x10] sm:$0xff]
    %v194 = vld [vmem:[%s3 + $0x18] sm:$0xff]
    %195 = vmatprep.subr.mxu0 0.0
    %196 = vmatpush1.msra.mxu0 %v191
    %197 = vmatprep.subr.mxu0 0.0
    %198 = vmatpush1.msra.mxu0 %v192
    %199 = vmatprep.subr.mxu0 0.0
    %200 = vmatpush1.msra.mxu0 %v193
    %201 = vmatprep.subr.mxu0 0.0
    %202 = vmatpush1.msra.mxu0 %v194
    %203 = vmatprep.subr.mxu0 0.0
    %204 = vmatpush1.msra.mxu0 0.0
    %205 = vmatprep.subr.mxu0 0.0
    %206 = vmatpush1.msra.mxu0 0.0
    %207 = vmatprep.subr.mxu0 0.0
    %208 = vmatpush1.msra.mxu0 0.0
    %209 = vmatprep.subr.mxu0 0.0
    %210 = vmatpush1.msra.mxu0 0.0
    %211 = vmatprep.subr.mxu0 0.0
    %212 = vmatpush1.msra.mxu0 0.0
    %213 = vmatprep.subr.mxu0 0.0
    %214 = vmatpush1.msra.mxu0 0.0
    %215 = vmatprep.subr.mxu0 0.0
    %216 = vmatpush1.msra.mxu0 0.0
    %217 = vmatprep.subr.mxu0 0.0
    %218 = vmatpush1.msra.mxu0 0.0
    %219 = vmatprep.subr.mxu0 0.0
    %220 = vmatpush1.msra.mxu0 0.0
    %221 = vmatprep.subr.mxu0 0.0
    %222 = vmatpush1.msra.mxu0 0.0
    %223 = vmatprep.subr.mxu0 0.0
    %224 = vmatpush1.msra.mxu0 0.0
    %225 = vmatprep.subr.mxu0 0.0
    %226 = vmatpush1.msra.mxu0 0.0
    %227 = vmatprep.subr.mxu0 0.0
    %228 = vmatpush1.msra.mxu0 0.0
    %229 = vmatprep.subr.mxu0 0.0
    %230 = vmatpush1.msra.mxu0 0.0
    %231 = vmatprep.subr.mxu0 0.0
    %232 = vmatpush1.msra.mxu0 0.0
    %233 = vmatprep.subr.mxu0 0.0
    %234 = vmatpush1.msra.mxu0 0.0
    %235 = vmatprep.subr.mxu0 0.0
    %236 = vmatpush1.msra.mxu0 0.0
    %237 = vmatprep.subr.mxu0 0.0
    %238 = vmatpush1.msra.mxu0 0.0
    %239 = vmatprep.subr.mxu0 0.0
    %240 = vmatpush1.msra.mxu0 0.0
    %241 = vmatprep.subr.mxu0 0.0
    %242 = vmatpush1.msra.mxu0 0.0
    %243 = vmatprep.subr.mxu0 0.0
    %244 = vmatpush1.msra.mxu0 0.0
    %245 = vmatprep.subr.mxu0 0.0
    %246 = vmatpush1.msra.mxu0 0.0
    %247 = vmatprep.subr.mxu0 0.0
    %248 = vmatpush1.msra.mxu0 0.0
    %249 = vmatprep.subr.mxu0 0.0
    %250 = vmatpush1.msra.mxu0 0.0
    %251 = vmatprep.subr.mxu0 0.0
    %252 = vmatpush1.msra.mxu0 0.0
    %253 = vmatprep.subr.mxu0 0.0
    %254 = vmatpush1.msra.mxu0 0.0
    %255 = vmatprep.subr.mxu0 0.0
    %256 = vmatpush1.msra.mxu0 0.0
    %257 = vmatprep.subr.mxu0 0.0
    %258 = vmatpush1.msra.mxu0 0.0
    %259 = vmatprep.mubr.f32.mxu0 0.0
    %260 = vmatmul.mubr.f32.gmra.mrb[0].mxu0 %v32
    %v261 = vpop.f32.mrb[0].mxu0
    %v262 = vadd.f32 0.0, %v261
    %v263 = vpop.f32.mrb[0].mxu0
    %264 = vmatprep.mubr.f32.mxu0 0.0
    %265 = vmatmul.mubr.f32.gmra.mrb[0].mxu0 %v35
    %v266 = vpop.f32.mrb[0].mxu0
    %v267 = vadd.f32 0.0, %v266
    %v268 = vpop.f32.mrb[0].mxu0
    %269 = vdwg.mxu0
    %vm270 = vcmask 64512
    %v272 = vsel %vm270, %v104, 0
    %v275 = vsel %vm270, %v183, 0
    %277 = vmatprep.subr.mxu0 0.0
    %278 = vmatpush1.xpose.msra.mxu0 %v275
    %279 = vmatprep.subr.mxu0 0.0
    %280 = vmatpush1.xpose.msra.mxu0 0.0
    %281 = vmatprep.subr.mxu0 0.0
    %282 = vmatpush1.xpose.msra.mxu0 0.0
    %283 = vmatprep.subr.mxu0 0.0
    %284 = vmatpush1.xpose.msra.mxu0 0.0
    %285 = vmatprep.subr.mxu0 0.0
    %286 = vmatpush1.xpose.msra.mxu0 0.0
    %287 = vmatprep.subr.mxu0 0.0
    %288 = vmatpush1.xpose.msra.mxu0 0.0
    %289 = vmatprep.subr.mxu0 0.0
    %290 = vmatpush1.xpose.msra.mxu0 0.0
    %291 = vmatprep.subr.mxu0 0.0
    %292 = vmatpush1.xpose.msra.mxu0 0.0
    %293 = vmatprep.subr.mxu0 0.0
    %294 = vmatpush1.xpose.msra.mxu0 0.0
    %295 = vmatprep.subr.mxu0 0.0
    %296 = vmatpush1.xpose.msra.mxu0 0.0
    %297 = vmatprep.subr.mxu0 0.0
    %298 = vmatpush1.xpose.msra.mxu0 0.0
    %299 = vmatprep.subr.mxu0 0.0
    %300 = vmatpush1.xpose.msra.mxu0 0.0
    %301 = vmatprep.subr.mxu0 0.0
    %302 = vmatpush1.xpose.msra.mxu0 0.0
    %303 = vmatprep.subr.mxu0 0.0
    %304 = vmatpush1.xpose.msra.mxu0 0.0
    %305 = vmatprep.subr.mxu0 0.0
    %306 = vmatpush1.xpose.msra.mxu0 0.0
    %307 = vmatprep.subr.mxu0 0.0
    %308 = vmatpush1.xpose.msra.mxu0 0.0
    %309 = vmatprep.subr.mxu0 0.0
    %310 = vmatpush1.xpose.msra.mxu0 0.0
    %311 = vmatprep.subr.mxu0 0.0
    %312 = vmatpush1.xpose.msra.mxu0 0.0
    %313 = vmatprep.subr.mxu0 0.0
    %314 = vmatpush1.xpose.msra.mxu0 0.0
    %315 = vmatprep.subr.mxu0 0.0
    %316 = vmatpush1.xpose.msra.mxu0 0.0
    %317 = vmatprep.subr.mxu0 0.0
    %318 = vmatpush1.xpose.msra.mxu0 0.0
    %319 = vmatprep.subr.mxu0 0.0
    %320 = vmatpush1.xpose.msra.mxu0 0.0
    %321 = vmatprep.subr.mxu0 0.0
    %322 = vmatpush1.xpose.msra.mxu0 0.0
    %323 = vmatprep.subr.mxu0 0.0
    %324 = vmatpush1.xpose.msra.mxu0 0.0
    %325 = vmatprep.subr.mxu0 0.0
    %326 = vmatpush1.xpose.msra.mxu0 0.0
    %327 = vmatprep.subr.mxu0 0.0
    %328 = vmatpush1.xpose.msra.mxu0 0.0
    %329 = vmatprep.subr.mxu0 0.0
    %330 = vmatpush1.xpose.msra.mxu0 0.0
    %331 = vmatprep.subr.mxu0 0.0
    %332 = vmatpush1.xpose.msra.mxu0 0.0
    %333 = vmatprep.subr.mxu0 0.0
    %334 = vmatpush1.xpose.msra.mxu0 0.0
    %335 = vmatprep.subr.mxu0 0.0
    %336 = vmatpush1.xpose.msra.mxu0 0.0
    %337 = vmatprep.subr.mxu0 0.0
    %338 = vmatpush1.xpose.msra.mxu0 0.0
    %339 = vmatprep.subr.mxu0 0.0
    %340 = vmatpush1.xpose.msra.mxu0 0.0
    %341 = vmatprep.mubr.f32.mxu0 0.0
    %342 = vmatmul.mubr.f32.gmra.mrb[0].mxu0 %v272
    %v343 = vpop.f32.mrb[0].mxu0
    %v344 = vadd.f32 0.0, %v343
    %v345 = vpop.f32.mrb[0].mxu0
    %346 = vdwg.mxu0
    %v348 = vsel %vm270, %v109, 0
    %v351 = vsel %vm270, %v188, 0
    %353 = vmatprep.subr.mxu0 0.0
    %354 = vmatpush1.xpose.msra.mxu0 %v351
    %355 = vmatprep.subr.mxu0 0.0
    %356 = vmatpush1.xpose.msra.mxu0 0.0
    %357 = vmatprep.subr.mxu0 0.0
    %358 = vmatpush1.xpose.msra.mxu0 0.0
    %359 = vmatprep.subr.mxu0 0.0
    %360 = vmatpush1.xpose.msra.mxu0 0.0
    %361 = vmatprep.subr.mxu0 0.0
    %362 = vmatpush1.xpose.msra.mxu0 0.0
    %363 = vmatprep.subr.mxu0 0.0
    %364 = vmatpush1.xpose.msra.mxu0 0.0
    %365 = vmatprep.subr.mxu0 0.0
    %366 = vmatpush1.xpose.msra.mxu0 0.0
    %367 = vmatprep.subr.mxu0 0.0
    %368 = vmatpush1.xpose.msra.mxu0 0.0
    %369 = vmatprep.subr.mxu0 0.0
    %370 = vmatpush1.xpose.msra.mxu0 0.0
    %371 = vmatprep.subr.mxu0 0.0
    %372 = vmatpush1.xpose.msra.mxu0 0.0
    %373 = vmatprep.subr.mxu0 0.0
    %374 = vmatpush1.xpose.msra.mxu0 0.0
    %375 = vmatprep.subr.mxu0 0.0
    %376 = vmatpush1.xpose.msra.mxu0 0.0
    %377 = vmatprep.subr.mxu0 0.0
    %378 = vmatpush1.xpose.msra.mxu0 0.0
    %379 = vmatprep.subr.mxu0 0.0
    %380 = vmatpush1.xpose.msra.mxu0 0.0
    %381 = vmatprep.subr.mxu0 0.0
    %382 = vmatpush1.xpose.msra.mxu0 0.0
    %383 = vmatprep.subr.mxu0 0.0
    %384 = vmatpush1.xpose.msra.mxu0 0.0
    %385 = vmatprep.subr.mxu0 0.0
    %386 = vmatpush1.xpose.msra.mxu0 0.0
    %387 = vmatprep.subr.mxu0 0.0
    %388 = vmatpush1.xpose.msra.mxu0 0.0
    %389 = vmatprep.subr.mxu0 0.0
    %390 = vmatpush1.xpose.msra.mxu0 0.0
    %391 = vmatprep.subr.mxu0 0.0
    %392 = vmatpush1.xpose.msra.mxu0 0.0
    %393 = vmatprep.subr.mxu0 0.0
    %394 = vmatpush1.xpose.msra.mxu0 0.0
    %395 = vmatprep.subr.mxu0 0.0
    %396 = vmatpush1.xpose.msra.mxu0 0.0
    %397 = vmatprep.subr.mxu0 0.0
    %398 = vmatpush1.xpose.msra.mxu0 0.0
    %399 = vmatprep.subr.mxu0 0.0
    %400 = vmatpush1.xpose.msra.mxu0 0.0
    %401 = vmatprep.subr.mxu0 0.0
    %402 = vmatpush1.xpose.msra.mxu0 0.0
    %403 = vmatprep.subr.mxu0 0.0
    %404 = vmatpush1.xpose.msra.mxu0 0.0
    %405 = vmatprep.subr.mxu0 0.0
    %406 = vmatpush1.xpose.msra.mxu0 0.0
    %407 = vmatprep.subr.mxu0 0.0
    %408 = vmatpush1.xpose.msra.mxu0 0.0
    %409 = vmatprep.subr.mxu0 0.0
    %410 = vmatpush1.xpose.msra.mxu0 0.0
    %411 = vmatprep.subr.mxu0 0.0
    %412 = vmatpush1.xpose.msra.mxu0 0.0
    %413 = vmatprep.subr.mxu0 0.0
    %414 = vmatpush1.xpose.msra.mxu0 0.0
    %415 = vmatprep.subr.mxu0 0.0
    %416 = vmatpush1.xpose.msra.mxu0 0.0
    %417 = vmatprep.mubr.f32.mxu0 0.0
    %418 = vmatmul.mubr.f32.gmra.mrb[0].mxu0 %v348
    %v419 = vpop.f32.mrb[0].mxu0
    %v420 = vadd.f32 0.0, %v419
    %v421 = vpop.f32.mrb[0].mxu0
    %422 = vdwg.mxu0
    %v423 = vmul.f32 %v344, 0.35355338
    %v424 = vmul.f32 %v420, 0.35355338
    %v425 = vsel %vm270, %v423, -inf
    %426 = vmax.xlane.f32.xlu0 %v425
    %v427 = vpop.xlane.xlu0 %426
    %v428 = vsel %vm270, %v424, -inf
    %429 = vmax.xlane.f32.xlu0 %v428
    %v430 = vpop.xlane.xlu0 %429
    %v431 = vsub.f32 %v423, %v427
    %v432 = vsub.f32 %v424, %v430
    %v433 = vmul.f32 %v431, 1.442695
    %v434 = vpow.pop %v433
    %v435 = vmul.f32 %v432, 1.442695
    %v436 = vpow.pop %v435
    %v437 = vsel %vm270, %v434, 0.0
    %438 = vadd.xlane.f32.xlu0 %v437
    %v439 = vpop.xlane.xlu0 %438
    %v440 = vsel %vm270, %v436, 0.0
    %441 = vadd.xlane.f32.xlu0 %v440
    %v442 = vpop.xlane.xlu0 %441
    %v443 = vrcp.pop %v439
    %v444 = vrcp.pop %v442
    %v445 = vmul.f32 %v434, %v443
    %v446 = vmul.f32 %v436, %v444
    %v448 = vsel %vm270, %v445, 0
    %450 = vmatprep.subr.mxu0 0.0
    %451 = vmatpush1.msra.mxu0 %v262
    %452 = vmatprep.subr.mxu0 0.0
    %453 = vmatpush1.msra.mxu0 0.0
    %454 = vmatprep.subr.mxu0 0.0
    %455 = vmatpush1.msra.mxu0 0.0
    %456 = vmatprep.subr.mxu0 0.0
    %457 = vmatpush1.msra.mxu0 0.0
    %458 = vmatprep.subr.mxu0 0.0
    %459 = vmatpush1.msra.mxu0 0.0
    %460 = vmatprep.subr.mxu0 0.0
    %461 = vmatpush1.msra.mxu0 0.0
    %462 = vmatprep.subr.mxu0 0.0
    %463 = vmatpush1.msra.mxu0 0.0
    %464 = vmatprep.subr.mxu0 0.0
    %465 = vmatpush1.msra.mxu0 0.0
    %466 = vmatprep.subr.mxu0 0.0
    %467 = vmatpush1.msra.mxu0 0.0
    %468 = vmatprep.subr.mxu0 0.0
    %469 = vmatpush1.msra.mxu0 0.0
    %470 = vmatprep.subr.mxu0 0.0
    %471 = vmatpush1.msra.mxu0 0.0
    %472 = vmatprep.subr.mxu0 0.0
    %473 = vmatpush1.msra.mxu0 0.0
    %474 = vmatprep.subr.mxu0 0.0
    %475 = vmatpush1.msra.mxu0 0.0
    %476 = vmatprep.subr.mxu0 0.0
    %477 = vmatpush1.msra.mxu0 0.0
    %478 = vmatprep.subr.mxu0 0.0
    %479 = vmatpush1.msra.mxu0 0.0
    %480 = vmatprep.subr.mxu0 0.0
    %481 = vmatpush1.msra.mxu0 0.0
    %482 = vmatprep.subr.mxu0 0.0
    %483 = vmatpush1.msra.mxu0 0.0
    %484 = vmatprep.subr.mxu0 0.0
    %485 = vmatpush1.msra.mxu0 0.0
    %486 = vmatprep.subr.mxu0 0.0
    %487 = vmatpush1.msra.mxu0 0.0
    %488 = vmatprep.subr.mxu0 0.0
    %489 = vmatpush1.msra.mxu0 0.0
    %490 = vmatprep.subr.mxu0 0.0
    %491 = vmatpush1.msra.mxu0 0.0
    %492 = vmatprep.subr.mxu0 0.0
    %493 = vmatpush1.msra.mxu0 0.0
    %494 = vmatprep.subr.mxu0 0.0
    %495 = vmatpush1.msra.mxu0 0.0
    %496 = vmatprep.subr.mxu0 0.0
    %497 = vmatpush1.msra.mxu0 0.0
    %498 = vmatprep.subr.mxu0 0.0
    %499 = vmatpush1.msra.mxu0 0.0
    %500 = vmatprep.subr.mxu0 0.0
    %501 = vmatpush1.msra.mxu0 0.0
    %502 = vmatprep.subr.mxu0 0.0
    %503 = vmatpush1.msra.mxu0 0.0
    %504 = vmatprep.subr.mxu0 0.0
    %505 = vmatpush1.msra.mxu0 0.0
    %506 = vmatprep.subr.mxu0 0.0
    %507 = vmatpush1.msra.mxu0 0.0
    %508 = vmatprep.subr.mxu0 0.0
    %509 = vmatpush1.msra.mxu0 0.0
    %510 = vmatprep.subr.mxu0 0.0
    %511 = vmatpush1.msra.mxu0 0.0
    %512 = vmatprep.subr.mxu0 0.0
    %513 = vmatpush1.msra.mxu0 0.0
    %514 = vmatprep.mubr.f32.mxu0 0.0
    %515 = vmatmul.mubr.f32.gmra.mrb[0].mxu0 %v448
    %v516 = vpop.f32.mrb[0].mxu0
    %v517 = vadd.f32 0.0, %v516
    %v518 = vpop.f32.mrb[0].mxu0
    %519 = vdwg.mxu0
    %v521 = vsel %vm270, %v446, 0
    %523 = vmatprep.subr.mxu0 0.0
    %524 = vmatpush1.msra.mxu0 %v267
    %525 = vmatprep.subr.mxu0 0.0
    %526 = vmatpush1.msra.mxu0 0.0
    %527 = vmatprep.subr.mxu0 0.0
    %528 = vmatpush1.msra.mxu0 0.0
    %529 = vmatprep.subr.mxu0 0.0
    %530 = vmatpush1.msra.mxu0 0.0
    %531 = vmatprep.subr.mxu0 0.0
    %532 = vmatpush1.msra.mxu0 0.0
    %533 = vmatprep.subr.mxu0 0.0
    %534 = vmatpush1.msra.mxu0 0.0
    %535 = vmatprep.subr.mxu0 0.0
    %536 = vmatpush1.msra.mxu0 0.0
    %537 = vmatprep.subr.mxu0 0.0
    %538 = vmatpush1.msra.mxu0 0.0
    %539 = vmatprep.subr.mxu0 0.0
    %540 = vmatpush1.msra.mxu0 0.0
    %541 = vmatprep.subr.mxu0 0.0
    %542 = vmatpush1.msra.mxu0 0.0
    %543 = vmatprep.subr.mxu0 0.0
    %544 = vmatpush1.msra.mxu0 0.0
    %545 = vmatprep.subr.mxu0 0.0
    %546 = vmatpush1.msra.mxu0 0.0
    %547 = vmatprep.subr.mxu0 0.0
    %548 = vmatpush1.msra.mxu0 0.0
    %549 = vmatprep.subr.mxu0 0.0
    %550 = vmatpush1.msra.mxu0 0.0
    %551 = vmatprep.subr.mxu0 0.0
    %552 = vmatpush1.msra.mxu0 0.0
    %553 = vmatprep.subr.mxu0 0.0
    %554 = vmatpush1.msra.mxu0 0.0
    %555 = vmatprep.subr.mxu0 0.0
    %556 = vmatpush1.msra.mxu0 0.0
    %557 = vmatprep.subr.mxu0 0.0
    %558 = vmatpush1.msra.mxu0 0.0
    %559 = vmatprep.subr.mxu0 0.0
    %560 = vmatpush1.msra.mxu0 0.0
    %561 = vmatprep.subr.mxu0 0.0
    %562 = vmatpush1.msra.mxu0 0.0
    %563 = vmatprep.subr.mxu0 0.0
    %564 = vmatpush1.msra.mxu0 0.0
    %565 = vmatprep.subr.mxu0 0.0
    %566 = vmatpush1.msra.mxu0 0.0
    %567 = vmatprep.subr.mxu0 0.0
    %568 = vmatpush1.msra.mxu0 0.0
    %569 = vmatprep.subr.mxu0 0.0
    %570 = vmatpush1.msra.mxu0 0.0
    %571 = vmatprep.subr.mxu0 0.0
    %572 = vmatpush1.msra.mxu0 0.0
    %573 = vmatprep.subr.mxu0 0.0
    %574 = vmatpush1.msra.mxu0 0.0
    %575 = vmatprep.subr.mxu0 0.0
    %576 = vmatpush1.msra.mxu0 0.0
    %577 = vmatprep.subr.mxu0 0.0
    %578 = vmatpush1.msra.mxu0 0.0
    %579 = vmatprep.subr.mxu0 0.0
    %580 = vmatpush1.msra.mxu0 0.0
    %581 = vmatprep.subr.mxu0 0.0
    %582 = vmatpush1.msra.mxu0 0.0
    %583 = vmatprep.subr.mxu0 0.0
    %584 = vmatpush1.msra.mxu0 0.0
    %585 = vmatprep.subr.mxu0 0.0
    %586 = vmatpush1.msra.mxu0 0.0
    %587 = vmatprep.mubr.f32.mxu0 0.0
    %588 = vmatmul.mubr.f32.gmra.mrb[0].mxu0 %v521
    %v589 = vpop.f32.mrb[0].mxu0
    %v590 = vadd.f32 0.0, %v589
    %v591 = vpop.f32.mrb[0].mxu0
    %592 = vdwg.mxu0
    %v593 = vld [vmem:[%s4] sm:$0xff]
    %s594 = scalar_lea.vmem %s1, 32
    %v595 = vld [vmem:[%s594] sm:$0xff]
    %v596 = vld [vmem:[%s594 + $0x8] sm:$0xff]
    %v597 = vld [vmem:[%s594 + $0x10] sm:$0xff]
    %v598 = vld [vmem:[%s594 + $0x18] sm:$0xff]
    %599 = vmatprep.subr.mxu0 0.0
    %600 = vmatpush1.msra.mxu0 %v595
    %601 = vmatprep.subr.mxu0 0.0
    %602 = vmatpush1.msra.mxu0 %v596
    %603 = vmatprep.subr.mxu0 0.0
    %604 = vmatpush1.msra.mxu0 %v597
    %605 = vmatprep.subr.mxu0 0.0
    %606 = vmatpush1.msra.mxu0 %v598
    %607 = vmatprep.subr.mxu0 0.0
    %608 = vmatpush1.msra.mxu0 0.0
    %609 = vmatprep.subr.mxu0 0.0
    %610 = vmatpush1.msra.mxu0 0.0
    %611 = vmatprep.subr.mxu0 0.0
    %612 = vmatpush1.msra.mxu0 0.0
    %613 = vmatprep.subr.mxu0 0.0
    %614 = vmatpush1.msra.mxu0 0.0
    %615 = vmatprep.subr.mxu0 0.0
    %616 = vmatpush1.msra.mxu0 0.0
    %617 = vmatprep.subr.mxu0 0.0
    %618 = vmatpush1.msra.mxu0 0.0
    %619 = vmatprep.subr.mxu0 0.0
    %620 = vmatpush1.msra.mxu0 0.0
    %621 = vmatprep.subr.mxu0 0.0
    %622 = vmatpush1.msra.mxu0 0.0
    %623 = vmatprep.subr.mxu0 0.0
    %624 = vmatpush1.msra.mxu0 0.0
    %625 = vmatprep.subr.mxu0 0.0
    %626 = vmatpush1.msra.mxu0 0.0
    %627 = vmatprep.subr.mxu0 0.0
    %628 = vmatpush1.msra.mxu0 0.0
    %629 = vmatprep.subr.mxu0 0.0
    %630 = vmatpush1.msra.mxu0 0.0
    %631 = vmatprep.subr.mxu0 0.0
    %632 = vmatpush1.msra.mxu0 0.0
    %633 = vmatprep.subr.mxu0 0.0
    %634 = vmatpush1.msra.mxu0 0.0
    %635 = vmatprep.subr.mxu0 0.0
    %636 = vmatpush1.msra.mxu0 0.0
    %637 = vmatprep.subr.mxu0 0.0
    %638 = vmatpush1.msra.mxu0 0.0
    %639 = vmatprep.subr.mxu0 0.0
    %640 = vmatpush1.msra.mxu0 0.0
    %641 = vmatprep.subr.mxu0 0.0
    %642 = vmatpush1.msra.mxu0 0.0
    %643 = vmatprep.subr.mxu0 0.0
    %644 = vmatpush1.msra.mxu0 0.0
    %645 = vmatprep.subr.mxu0 0.0
    %646 = vmatpush1.msra.mxu0 0.0
    %647 = vmatprep.subr.mxu0 0.0
    %648 = vmatpush1.msra.mxu0 0.0
    %649 = vmatprep.subr.mxu0 0.0
    %650 = vmatpush1.msra.mxu0 0.0
    %651 = vmatprep.subr.mxu0 0.0
    %652 = vmatpush1.msra.mxu0 0.0
    %653 = vmatprep.subr.mxu0 0.0
    %654 = vmatpush1.msra.mxu0 0.0
    %655 = vmatprep.subr.mxu0 0.0
    %656 = vmatpush1.msra.mxu0 0.0
    %657 = vmatprep.subr.mxu0 0.0
    %658 = vmatpush1.msra.mxu0 0.0
    %659 = vmatprep.subr.mxu0 0.0
    %660 = vmatpush1.msra.mxu0 0.0
    %661 = vmatprep.subr.mxu0 0.0
    %662 = vmatpush1.msra.mxu0 0.0
    %663 = vmatprep.mubr.f32.mxu0 0.0
    %664 = vmatmul.mubr.f32.gmra.mrb[0].mxu0 %v32
    %v665 = vpop.f32.mrb[0].mxu0
    %v666 = vadd.f32 0.0, %v665
    %v667 = vpop.f32.mrb[0].mxu0
    %668 = vmatprep.mubr.f32.mxu0 0.0
    %669 = vmatmul.mubr.f32.gmra.mrb[0].mxu0 %v35
    %v670 = vpop.f32.mrb[0].mxu0
    %v671 = vadd.f32 0.0, %v670
    %v672 = vpop.f32.mrb[0].mxu0
    %673 = vdwg.mxu0
    %s674 = scalar_lea.vmem %s2, 32
    %v675 = vld [vmem:[%s674] sm:$0xff]
    %v676 = vld [vmem:[%s674 + $0x8] sm:$0xff]
    %v677 = vld [vmem:[%s674 + $0x10] sm:$0xff]
    %v678 = vld [vmem:[%s674 + $0x18] sm:$0xff]
    %679 = vmatprep.subr.mxu0 0.0
    %680 = vmatpush1.msra.mxu0 %v675
    %681 = vmatprep.subr.mxu0 0.0
    %682 = vmatpush1.msra.mxu0 %v676
    %683 = vmatprep.subr.mxu0 0.0
    %684 = vmatpush1.msra.mxu0 %v677
    %685 = vmatprep.subr.mxu0 0.0
    %686 = vmatpush1.msra.mxu0 %v678
    %687 = vmatprep.subr.mxu0 0.0
    %688 = vmatpush1.msra.mxu0 0.0
    %689 = vmatprep.subr.mxu0 0.0
    %690 = vmatpush1.msra.mxu0 0.0
    %691 = vmatprep.subr.mxu0 0.0
    %692 = vmatpush1.msra.mxu0 0.0
    %693 = vmatprep.subr.mxu0 0.0
    %694 = vmatpush1.msra.mxu0 0.0
    %695 = vmatprep.subr.mxu0 0.0
    %696 = vmatpush1.msra.mxu0 0.0
    %697 = vmatprep.subr.mxu0 0.0
    %698 = vmatpush1.msra.mxu0 0.0
    %699 = vmatprep.subr.mxu0 0.0
    %700 = vmatpush1.msra.mxu0 0.0
    %701 = vmatprep.subr.mxu0 0.0
    %702 = vmatpush1.msra.mxu0 0.0
    %703 = vmatprep.subr.mxu0 0.0
    %704 = vmatpush1.msra.mxu0 0.0
    %705 = vmatprep.subr.mxu0 0.0
    %706 = vmatpush1.msra.mxu0 0.0
    %707 = vmatprep.subr.mxu0 0.0
    %708 = vmatpush1.msra.mxu0 0.0
    %709 = vmatprep.subr.mxu0 0.0
    %710 = vmatpush1.msra.mxu0 0.0
    %711 = vmatprep.subr.mxu0 0.0
    %712 = vmatpush1.msra.mxu0 0.0
    %713 = vmatprep.subr.mxu0 0.0
    %714 = vmatpush1.msra.mxu0 0.0
    %715 = vmatprep.subr.mxu0 0.0
    %716 = vmatpush1.msra.mxu0 0.0
    %717 = vmatprep.subr.mxu0 0.0
    %718 = vmatpush1.msra.mxu0 0.0
    %719 = vmatprep.subr.mxu0 0.0
    %720 = vmatpush1.msra.mxu0 0.0
    %721 = vmatprep.subr.mxu0 0.0
    %722 = vmatpush1.msra.mxu0 0.0
    %723 = vmatprep.subr.mxu0 0.0
    %724 = vmatpush1.msra.mxu0 0.0
    %725 = vmatprep.subr.mxu0 0.0
    %726 = vmatpush1.msra.mxu0 0.0
    %727 = vmatprep.subr.mxu0 0.0
    %728 = vmatpush1.msra.mxu0 0.0
    %729 = vmatprep.subr.mxu0 0.0
    %730 = vmatpush1.msra.mxu0 0.0
    %731 = vmatprep.subr.mxu0 0.0
    %732 = vmatpush1.msra.mxu0 0.0
    %733 = vmatprep.subr.mxu0 0.0
    %734 = vmatpush1.msra.mxu0 0.0
    %735 = vmatprep.subr.mxu0 0.0
    %736 = vmatpush1.msra.mxu0 0.0
    %737 = vmatprep.subr.mxu0 0.0
    %738 = vmatpush1.msra.mxu0 0.0
    %739 = vmatprep.subr.mxu0 0.0
    %740 = vmatpush1.msra.mxu0 0.0
    %741 = vmatprep.subr.mxu0 0.0
    %742 = vmatpush1.msra.mxu0 0.0
    %743 = vmatprep.mubr.f32.mxu0 0.0
    %744 = vmatmul.mubr.f32.gmra.mrb[0].mxu0 %v32
    %v745 = vpop.f32.mrb[0].mxu0
    %v746 = vadd.f32 0.0, %v745
    %v747 = vpop.f32.mrb[0].mxu0
    %748 = vmatprep.mubr.f32.mxu0 0.0
    %749 = vmatmul.mubr.f32.gmra.mrb[0].mxu0 %v35
    %v750 = vpop.f32.mrb[0].mxu0
    %v751 = vadd.f32 0.0, %v750
    %v752 = vpop.f32.mrb[0].mxu0
    %753 = vdwg.mxu0
    %s754 = scalar_lea.vmem %s3, 32
    %v755 = vld [vmem:[%s754] sm:$0xff]
    %v756 = vld [vmem:[%s754 + $0x8] sm:$0xff]
    %v757 = vld [vmem:[%s754 + $0x10] sm:$0xff]
    %v758 = vld [vmem:[%s754 + $0x18] sm:$0xff]
    %759 = vmatprep.subr.mxu0 0.0
    %760 = vmatpush1.msra.mxu0 %v755
    %761 = vmatprep.subr.mxu0 0.0
    %762 = vmatpush1.msra.mxu0 %v756
    %763 = vmatprep.subr.mxu0 0.0
    %764 = vmatpush1.msra.mxu0 %v757
    %765 = vmatprep.subr.mxu0 0.0
    %766 = vmatpush1.msra.mxu0 %v758
    %767 = vmatprep.subr.mxu0 0.0
    %768 = vmatpush1.msra.mxu0 0.0
    %769 = vmatprep.subr.mxu0 0.0
    %770 = vmatpush1.msra.mxu0 0.0
    %771 = vmatprep.subr.mxu0 0.0
    %772 = vmatpush1.msra.mxu0 0.0
    %773 = vmatprep.subr.mxu0 0.0
    %774 = vmatpush1.msra.mxu0 0.0
    %775 = vmatprep.subr.mxu0 0.0
    %776 = vmatpush1.msra.mxu0 0.0
    %777 = vmatprep.subr.mxu0 0.0
    %778 = vmatpush1.msra.mxu0 0.0
    %779 = vmatprep.subr.mxu0 0.0
    %780 = vmatpush1.msra.mxu0 0.0
    %781 = vmatprep.subr.mxu0 0.0
    %782 = vmatpush1.msra.mxu0 0.0
    %783 = vmatprep.subr.mxu0 0.0
    %784 = vmatpush1.msra.mxu0 0.0
    %785 = vmatprep.subr.mxu0 0.0
    %786 = vmatpush1.msra.mxu0 0.0
    %787 = vmatprep.subr.mxu0 0.0
    %788 = vmatpush1.msra.mxu0 0.0
    %789 = vmatprep.subr.mxu0 0.0
    %790 = vmatpush1.msra.mxu0 0.0
    %791 = vmatprep.subr.mxu0 0.0
    %792 = vmatpush1.msra.mxu0 0.0
    %793 = vmatprep.subr.mxu0 0.0
    %794 = vmatpush1.msra.mxu0 0.0
    %795 = vmatprep.subr.mxu0 0.0
    %796 = vmatpush1.msra.mxu0 0.0
    %797 = vmatprep.subr.mxu0 0.0
    %798 = vmatpush1.msra.mxu0 0.0
    %799 = vmatprep.subr.mxu0 0.0
    %800 = vmatpush1.msra.mxu0 0.0
    %801 = vmatprep.subr.mxu0 0.0
    %802 = vmatpush1.msra.mxu0 0.0
    %803 = vmatprep.subr.mxu0 0.0
    %804 = vmatpush1.msra.mxu0 0.0
    %805 = vmatprep.subr.mxu0 0.0
    %806 = vmatpush1.msra.mxu0 0.0
    %807 = vmatprep.subr.mxu0 0.0
    %808 = vmatpush1.msra.mxu0 0.0
    %809 = vmatprep.subr.mxu0 0.0
    %810 = vmatpush1.msra.mxu0 0.0
    %811 = vmatprep.subr.mxu0 0.0
    %812 = vmatpush1.msra.mxu0 0.0
    %813 = vmatprep.subr.mxu0 0.0
    %814 = vmatpush1.msra.mxu0 0.0
    %815 = vmatprep.subr.mxu0 0.0
    %816 = vmatpush1.msra.mxu0 0.0
    %817 = vmatprep.subr.mxu0 0.0
    %818 = vmatpush1.msra.mxu0 0.0
    %819 = vmatprep.subr.mxu0 0.0
    %820 = vmatpush1.msra.mxu0 0.0
    %821 = vmatprep.subr.mxu0 0.0
    %822 = vmatpush1.msra.mxu0 0.0
    %823 = vmatprep.mubr.f32.mxu0 0.0
    %824 = vmatmul.mubr.f32.gmra.mrb[0].mxu0 %v32
    %v825 = vpop.f32.mrb[0].mxu0
    %v826 = vadd.f32 0.0, %v825
    %v827 = vpop.f32.mrb[0].mxu0
    %828 = vmatprep.mubr.f32.mxu0 0.0
    %829 = vmatmul.mubr.f32.gmra.mrb[0].mxu0 %v35
    %v830 = vpop.f32.mrb[0].mxu0
    %v831 = vadd.f32 0.0, %v830
    %v832 = vpop.f32.mrb[0].mxu0
    %833 = vdwg.mxu0
    %v835 = vsel %vm270, %v666, 0
    %v838 = vsel %vm270, %v746, 0
    %840 = vmatprep.subr.mxu0 0.0
    %841 = vmatpush1.xpose.msra.mxu0 %v838
    %842 = vmatprep.subr.mxu0 0.0
    %843 = vmatpush1.xpose.msra.mxu0 0.0
    %844 = vmatprep.subr.mxu0 0.0
    %845 = vmatpush1.xpose.msra.mxu0 0.0
    %846 = vmatprep.subr.mxu0 0.0
    %847 = vmatpush1.xpose.msra.mxu0 0.0
    %848 = vmatprep.subr.mxu0 0.0
    %849 = vmatpush1.xpose.msra.mxu0 0.0
    %850 = vmatprep.subr.mxu0 0.0
    %851 = vmatpush1.xpose.msra.mxu0 0.0
    %852 = vmatprep.subr.mxu0 0.0
    %853 = vmatpush1.xpose.msra.mxu0 0.0
    %854 = vmatprep.subr.mxu0 0.0
    %855 = vmatpush1.xpose.msra.mxu0 0.0
    %856 = vmatprep.subr.mxu0 0.0
    %857 = vmatpush1.xpose.msra.mxu0 0.0
    %858 = vmatprep.subr.mxu0 0.0
    %859 = vmatpush1.xpose.msra.mxu0 0.0
    %860 = vmatprep.subr.mxu0 0.0
    %861 = vmatpush1.xpose.msra.mxu0 0.0
    %862 = vmatprep.subr.mxu0 0.0
    %863 = vmatpush1.xpose.msra.mxu0 0.0
    %864 = vmatprep.subr.mxu0 0.0
    %865 = vmatpush1.xpose.msra.mxu0 0.0
    %866 = vmatprep.subr.mxu0 0.0
    %867 = vmatpush1.xpose.msra.mxu0 0.0
    %868 = vmatprep.subr.mxu0 0.0
    %869 = vmatpush1.xpose.msra.mxu0 0.0
    %870 = vmatprep.subr.mxu0 0.0
    %871 = vmatpush1.xpose.msra.mxu0 0.0
    %872 = vmatprep.subr.mxu0 0.0
    %873 = vmatpush1.xpose.msra.mxu0 0.0
    %874 = vmatprep.subr.mxu0 0.0
    %875 = vmatpush1.xpose.msra.mxu0 0.0
    %876 = vmatprep.subr.mxu0 0.0
    %877 = vmatpush1.xpose.msra.mxu0 0.0
    %878 = vmatprep.subr.mxu0 0.0
    %879 = vmatpush1.xpose.msra.mxu0 0.0
    %880 = vmatprep.subr.mxu0 0.0
    %881 = vmatpush1.xpose.msra.mxu0 0.0
    %882 = vmatprep.subr.mxu0 0.0
    %883 = vmatpush1.xpose.msra.mxu0 0.0
    %884 = vmatprep.subr.mxu0 0.0
    %885 = vmatpush1.xpose.msra.mxu0 0.0
    %886 = vmatprep.subr.mxu0 0.0
    %887 = vmatpush1.xpose.msra.mxu0 0.0
    %888 = vmatprep.subr.mxu0 0.0
    %889 = vmatpush1.xpose.msra.mxu0 0.0
    %890 = vmatprep.subr.mxu0 0.0
    %891 = vmatpush1.xpose.msra.mxu0 0.0
    %892 = vmatprep.subr.mxu0 0.0
    %893 = vmatpush1.xpose.msra.mxu0 0.0
    %894 = vmatprep.subr.mxu0 0.0
    %895 = vmatpush1.xpose.msra.mxu0 0.0
    %896 = vmatprep.subr.mxu0 0.0
    %897 = vmatpush1.xpose.msra.mxu0 0.0
    %898 = vmatprep.subr.mxu0 0.0
    %899 = vmatpush1.xpose.msra.mxu0 0.0
    %900 = vmatprep.subr.mxu0 0.0
    %901 = vmatpush1.xpose.msra.mxu0 0.0
    %902 = vmatprep.subr.mxu0 0.0
    %903 = vmatpush1.xpose.msra.mxu0 0.0
    %904 = vmatprep.mubr.f32.mxu0 0.0
    %905 = vmatmul.mubr.f32.gmra.mrb[0].mxu0 %v835
    %v906 = vpop.f32.mrb[0].mxu0
    %v907 = vadd.f32 0.0, %v906
    %v908 = vpop.f32.mrb[0].mxu0
    %909 = vdwg.mxu0
    %v911 = vsel %vm270, %v671, 0
    %v914 = vsel %vm270, %v751, 0
    %916 = vmatprep.subr.mxu0 0.0
    %917 = vmatpush1.xpose.msra.mxu0 %v914
    %918 = vmatprep.subr.mxu0 0.0
    %919 = vmatpush1.xpose.msra.mxu0 0.0
    %920 = vmatprep.subr.mxu0 0.0
    %921 = vmatpush1.xpose.msra.mxu0 0.0
    %922 = vmatprep.subr.mxu0 0.0
    %923 = vmatpush1.xpose.msra.mxu0 0.0
    %924 = vmatprep.subr.mxu0 0.0
    %925 = vmatpush1.xpose.msra.mxu0 0.0
    %926 = vmatprep.subr.mxu0 0.0
    %927 = vmatpush1.xpose.msra.mxu0 0.0
    %928 = vmatprep.subr.mxu0 0.0
    %929 = vmatpush1.xpose.msra.mxu0 0.0
    %930 = vmatprep.subr.mxu0 0.0
    %931 = vmatpush1.xpose.msra.mxu0 0.0
    %932 = vmatprep.subr.mxu0 0.0
    %933 = vmatpush1.xpose.msra.mxu0 0.0
    %934 = vmatprep.subr.mxu0 0.0
    %935 = vmatpush1.xpose.msra.mxu0 0.0
    %936 = vmatprep.subr.mxu0 0.0
    %937 = vmatpush1.xpose.msra.mxu0 0.0
    %938 = vmatprep.subr.mxu0 0.0
    %939 = vmatpush1.xpose.msra.mxu0 0.0
    %940 = vmatprep.subr.mxu0 0.0
    %941 = vmatpush1.xpose.msra.mxu0 0.0
    %942 = vmatprep.subr.mxu0 0.0
    %943 = vmatpush1.xpose.msra.mxu0 0.0
    %944 = vmatprep.subr.mxu0 0.0
    %945 = vmatpush1.xpose.msra.mxu0 0.0
    %946 = vmatprep.subr.mxu0 0.0
    %947 = vmatpush1.xpose.msra.mxu0 0.0
    %948 = vmatprep.subr.mxu0 0.0
    %949 = vmatpush1.xpose.msra.mxu0 0.0
    %950 = vmatprep.subr.mxu0 0.0
    %951 = vmatpush1.xpose.msra.mxu0 0.0
    %952 = vmatprep.subr.mxu0 0.0
    %953 = vmatpush1.xpose.msra.mxu0 0.0
    %954 = vmatprep.subr.mxu0 0.0
    %955 = vmatpush1.xpose.msra.mxu0 0.0
    %956 = vmatprep.subr.mxu0 0.0
    %957 = vmatpush1.xpose.msra.mxu0 0.0
    %958 = vmatprep.subr.mxu0 0.0
    %959 = vmatpush1.xpose.msra.mxu0 0.0
    %960 = vmatprep.subr.mxu0 0.0
    %961 = vmatpush1.xpose.msra.mxu0 0.0
    %962 = vmatprep.subr.mxu0 0.0
    %963 = vmatpush1.xpose.msra.mxu0 0.0
    %964 = vmatprep.subr.mxu0 0.0
    %965 = vmatpush1.xpose.msra.mxu0 0.0
    %966 = vmatprep.subr.mxu0 0.0
    %967 = vmatpush1.xpose.msra.mxu0 0.0
    %968 = vmatprep.subr.mxu0 0.0
    %969 = vmatpush1.xpose.msra.mxu0 0.0
    %970 = vmatprep.subr.mxu0 0.0
    %971 = vmatpush1.xpose.msra.mxu0 0.0
    %972 = vmatprep.subr.mxu0 0.0
    %973 = vmatpush1.xpose.msra.mxu0 0.0
    %974 = vmatprep.subr.mxu0 0.0
    %975 = vmatpush1.xpose.msra.mxu0 0.0
    %976 = vmatprep.subr.mxu0 0.0
    %977 = vmatpush1.xpose.msra.mxu0 0.0
    %978 = vmatprep.subr.mxu0 0.0
    %979 = vmatpush1.xpose.msra.mxu0 0.0
    %980 = vmatprep.mubr.f32.mxu0 0.0
    %981 = vmatmul.mubr.f32.gmra.mrb[0].mxu0 %v911
    %v982 = vpop.f32.mrb[0].mxu0
    %v983 = vadd.f32 0.0, %v982
    %v984 = vpop.f32.mrb[0].mxu0
    %985 = vdwg.mxu0
    %v986 = vmul.f32 %v907, 0.35355338
    %v987 = vmul.f32 %v983, 0.35355338
    %v988 = vsel %vm270, %v986, -inf
    %989 = vmax.xlane.f32.xlu0 %v988
    %v990 = vpop.xlane.xlu0 %989
    %v991 = vsel %vm270, %v987, -inf
    %992 = vmax.xlane.f32.xlu0 %v991
    %v993 = vpop.xlane.xlu0 %992
    %v994 = vsub.f32 %v986, %v990
    %v995 = vsub.f32 %v987, %v993
    %v996 = vmul.f32 %v994, 1.442695
    %v997 = vpow.pop %v996
    %v998 = vmul.f32 %v995, 1.442695
    %v999 = vpow.pop %v998
    %v1000 = vsel %vm270, %v997, 0.0
    %1001 = vadd.xlane.f32.xlu0 %v1000
    %v1002 = vpop.xlane.xlu0 %1001
    %v1003 = vsel %vm270, %v999, 0.0
    %1004 = vadd.xlane.f32.xlu0 %v1003
    %v1005 = vpop.xlane.xlu0 %1004
    %v1006 = vrcp.pop %v1002
    %v1007 = vrcp.pop %v1005
    %v1008 = vmul.f32 %v997, %v1006
    %v1009 = vmul.f32 %v999, %v1007
    %v1011 = vsel %vm270, %v1008, 0
    %1013 = vmatprep.subr.mxu0 0.0
    %1014 = vmatpush1.msra.mxu0 %v826
    %1015 = vmatprep.subr.mxu0 0.0
    %1016 = vmatpush1.msra.mxu0 0.0
    %1017 = vmatprep.subr.mxu0 0.0
    %1018 = vmatpush1.msra.mxu0 0.0
    %1019 = vmatprep.subr.mxu0 0.0
    %1020 = vmatpush1.msra.mxu0 0.0
    %1021 = vmatprep.subr.mxu0 0.0
    %1022 = vmatpush1.msra.mxu0 0.0
    %1023 = vmatprep.subr.mxu0 0.0
    %1024 = vmatpush1.msra.mxu0 0.0
    %1025 = vmatprep.subr.mxu0 0.0
    %1026 = vmatpush1.msra.mxu0 0.0
    %1027 = vmatprep.subr.mxu0 0.0
    %1028 = vmatpush1.msra.mxu0 0.0
    %1029 = vmatprep.subr.mxu0 0.0
    %1030 = vmatpush1.msra.mxu0 0.0
    %1031 = vmatprep.subr.mxu0 0.0
    %1032 = vmatpush1.msra.mxu0 0.0
    %1033 = vmatprep.subr.mxu0 0.0
    %1034 = vmatpush1.msra.mxu0 0.0
    %1035 = vmatprep.subr.mxu0 0.0
    %1036 = vmatpush1.msra.mxu0 0.0
    %1037 = vmatprep.subr.mxu0 0.0
    %1038 = vmatpush1.msra.mxu0 0.0
    %1039 = vmatprep.subr.mxu0 0.0
    %1040 = vmatpush1.msra.mxu0 0.0
    %1041 = vmatprep.subr.mxu0 0.0
    %1042 = vmatpush1.msra.mxu0 0.0
    %1043 = vmatprep.subr.mxu0 0.0
    %1044 = vmatpush1.msra.mxu0 0.0
    %1045 = vmatprep.subr.mxu0 0.0
    %1046 = vmatpush1.msra.mxu0 0.0
    %1047 = vmatprep.subr.mxu0 0.0
    %1048 = vmatpush1.msra.mxu0 0.0
    %1049 = vmatprep.subr.mxu0 0.0
    %1050 = vmatpush1.msra.mxu0 0.0
    %1051 = vmatprep.subr.mxu0 0.0
    %1052 = vmatpush1.msra.mxu0 0.0
    %1053 = vmatprep.subr.mxu0 0.0
    %1054 = vmatpush1.msra.mxu0 0.0
    %1055 = vmatprep.subr.mxu0 0.0
    %1056 = vmatpush1.msra.mxu0 0.0
    %1057 = vmatprep.subr.mxu0 0.0
    %1058 = vmatpush1.msra.mxu0 0.0
    %1059 = vmatprep.subr.mxu0 0.0
    %1060 = vmatpush1.msra.mxu0 0.0
    %1061 = vmatprep.subr.mxu0 0.0
    %1062 = vmatpush1.msra.mxu0 0.0
    %1063 = vmatprep.subr.mxu0 0.0
    %1064 = vmatpush1.msra.mxu0 0.0
    %1065 = vmatprep.subr.mxu0 0.0
    %1066 = vmatpush1.msra.mxu0 0.0
    %1067 = vmatprep.subr.mxu0 0.0
    %1068 = vmatpush1.msra.mxu0 0.0
    %1069 = vmatprep.subr.mxu0 0.0
    %1070 = vmatpush1.msra.mxu0 0.0
    %1071 = vmatprep.subr.mxu0 0.0
    %1072 = vmatpush1.msra.mxu0 0.0
    %1073 = vmatprep.subr.mxu0 0.0
    %1074 = vmatpush1.msra.mxu0 0.0
    %1075 = vmatprep.subr.mxu0 0.0
    %1076 = vmatpush1.msra.mxu0 0.0
    %1077 = vmatprep.mubr.f32.mxu0 0.0
    %1078 = vmatmul.mubr.f32.gmra.mrb[0].mxu0 %v1011
    %v1079 = vpop.f32.mrb[0].mxu0
    %v1080 = vadd.f32 0.0, %v1079
    %v1081 = vpop.f32.mrb[0].mxu0
    %1082 = vdwg.mxu0
    %v1084 = vsel %vm270, %v1009, 0
    %1086 = vmatprep.subr.mxu0 0.0
    %1087 = vmatpush1.msra.mxu0 %v831
    %1088 = vmatprep.subr.mxu0 0.0
    %1089 = vmatpush1.msra.mxu0 0.0
    %1090 = vmatprep.subr.mxu0 0.0
    %1091 = vmatpush1.msra.mxu0 0.0
    %1092 = vmatprep.subr.mxu0 0.0
    %1093 = vmatpush1.msra.mxu0 0.0
    %1094 = vmatprep.subr.mxu0 0.0
    %1095 = vmatpush1.msra.mxu0 0.0
    %1096 = vmatprep.subr.mxu0 0.0
    %1097 = vmatpush1.msra.mxu0 0.0
    %1098 = vmatprep.subr.mxu0 0.0
    %1099 = vmatpush1.msra.mxu0 0.0
    %1100 = vmatprep.subr.mxu0 0.0
    %1101 = vmatpush1.msra.mxu0 0.0
    %1102 = vmatprep.subr.mxu0 0.0
    %1103 = vmatpush1.msra.mxu0 0.0
    %1104 = vmatprep.subr.mxu0 0.0
    %1105 = vmatpush1.msra.mxu0 0.0
    %1106 = vmatprep.subr.mxu0 0.0
    %1107 = vmatpush1.msra.mxu0 0.0
    %1108 = vmatprep.subr.mxu0 0.0
    %1109 = vmatpush1.msra.mxu0 0.0
    %1110 = vmatprep.subr.mxu0 0.0
    %1111 = vmatpush1.msra.mxu0 0.0
    %1112 = vmatprep.subr.mxu0 0.0
    %1113 = vmatpush1.msra.mxu0 0.0
    %1114 = vmatprep.subr.mxu0 0.0
    %1115 = vmatpush1.msra.mxu0 0.0
    %1116 = vmatprep.subr.mxu0 0.0
    %1117 = vmatpush1.msra.mxu0 0.0
    %1118 = vmatprep.subr.mxu0 0.0
    %1119 = vmatpush1.msra.mxu0 0.0
    %1120 = vmatprep.subr.mxu0 0.0
    %1121 = vmatpush1.msra.mxu0 0.0
    %1122 = vmatprep.subr.mxu0 0.0
    %1123 = vmatpush1.msra.mxu0 0.0
    %1124 = vmatprep.subr.mxu0 0.0
    %1125 = vmatpush1.msra.mxu0 0.0
    %1126 = vmatprep.subr.mxu0 0.0
    %1127 = vmatpush1.msra.mxu0 0.0
    %1128 = vmatprep.subr.mxu0 0.0
    %1129 = vmatpush1.msra.mxu0 0.0
    %1130 = vmatprep.subr.mxu0 0.0
    %1131 = vmatpush1.msra.mxu0 0.0
    %1132 = vmatprep.subr.mxu0 0.0
    %1133 = vmatpush1.msra.mxu0 0.0
    %1134 = vmatprep.subr.mxu0 0.0
    %1135 = vmatpush1.msra.mxu0 0.0
    %1136 = vmatprep.subr.mxu0 0.0
    %1137 = vmatpush1.msra.mxu0 0.0
    %1138 = vmatprep.subr.mxu0 0.0
    %1139 = vmatpush1.msra.mxu0 0.0
    %1140 = vmatprep.subr.mxu0 0.0
    %1141 = vmatpush1.msra.mxu0 0.0
    %1142 = vmatprep.subr.mxu0 0.0
    %1143 = vmatpush1.msra.mxu0 0.0
    %1144 = vmatprep.subr.mxu0 0.0
    %1145 = vmatpush1.msra.mxu0 0.0
    %1146 = vmatprep.subr.mxu0 0.0
    %1147 = vmatpush1.msra.mxu0 0.0
    %1148 = vmatprep.subr.mxu0 0.0
    %1149 = vmatpush1.msra.mxu0 0.0
    %1150 = vmatprep.mubr.f32.mxu0 0.0
    %1151 = vmatmul.mubr.f32.gmra.mrb[0].mxu0 %v1084
    %v1152 = vpop.f32.mrb[0].mxu0
    %v1153 = vadd.f32 0.0, %v1152
    %v1154 = vpop.f32.mrb[0].mxu0
    %1155 = vdwg.mxu0
    %s1156 = scalar_lea.vmem %s4, 8
    %v1157 = vld [vmem:[%s1156] sm:$0xff]
    %v1159 = vsel %vm270, %v1080, 0
    %v1162 = vsel %vm270, %v1153, 0
    %1164 = vmatprep.subr.mxu0 0.0
    %1165 = vmatpush1.msra.mxu0 %v1157
    %1166 = vmatprep.subr.mxu0 0.0
    %1167 = vmatpush1.msra.mxu0 0.0
    %1168 = vmatprep.subr.mxu0 0.0
    %1169 = vmatpush1.msra.mxu0 0.0
    %1170 = vmatprep.subr.mxu0 0.0
    %1171 = vmatpush1.msra.mxu0 0.0
    %1172 = vmatprep.subr.mxu0 0.0
    %1173 = vmatpush1.msra.mxu0 0.0
    %1174 = vmatprep.subr.mxu0 0.0
    %1175 = vmatpush1.msra.mxu0 0.0
    %1176 = vmatprep.subr.mxu0 0.0
    %1177 = vmatpush1.msra.mxu0 0.0
    %1178 = vmatprep.subr.mxu0 0.0
    %1179 = vmatpush1.msra.mxu0 0.0
    %1180 = vmatprep.subr.mxu0 0.0
    %1181 = vmatpush1.msra.mxu0 0.0
    %1182 = vmatprep.subr.mxu0 0.0
    %1183 = vmatpush1.msra.mxu0 0.0
    %1184 = vmatprep.subr.mxu0 0.0
    %1185 = vmatpush1.msra.mxu0 0.0
    %1186 = vmatprep.subr.mxu0 0.0
    %1187 = vmatpush1.msra.mxu0 0.0
    %1188 = vmatprep.subr.mxu0 0.0
    %1189 = vmatpush1.msra.mxu0 0.0
    %1190 = vmatprep.subr.mxu0 0.0
    %1191 = vmatpush1.msra.mxu0 0.0
    %1192 = vmatprep.subr.mxu0 0.0
    %1193 = vmatpush1.msra.mxu0 0.0
    %1194 = vmatprep.subr.mxu0 0.0
    %1195 = vmatpush1.msra.mxu0 0.0
    %1196 = vmatprep.subr.mxu0 0.0
    %1197 = vmatpush1.msra.mxu0 0.0
    %1198 = vmatprep.subr.mxu0 0.0
    %1199 = vmatpush1.msra.mxu0 0.0
    %1200 = vmatprep.subr.mxu0 0.0
    %1201 = vmatpush1.msra.mxu0 0.0
    %1202 = vmatprep.subr.mxu0 0.0
    %1203 = vmatpush1.msra.mxu0 0.0
    %1204 = vmatprep.subr.mxu0 0.0
    %1205 = vmatpush1.msra.mxu0 0.0
    %1206 = vmatprep.subr.mxu0 0.0
    %1207 = vmatpush1.msra.mxu0 0.0
    %1208 = vmatprep.subr.mxu0 0.0
    %1209 = vmatpush1.msra.mxu0 0.0
    %1210 = vmatprep.subr.mxu0 0.0
    %1211 = vmatpush1.msra.mxu0 0.0
    %1212 = vmatprep.subr.mxu0 0.0
    %1213 = vmatpush1.msra.mxu0 0.0
    %1214 = vmatprep.subr.mxu0 0.0
    %1215 = vmatpush1.msra.mxu0 0.0
    %1216 = vmatprep.subr.mxu0 0.0
    %1217 = vmatpush1.msra.mxu0 0.0
    %1218 = vmatprep.subr.mxu0 0.0
    %1219 = vmatpush1.msra.mxu0 0.0
    %1220 = vmatprep.subr.mxu0 0.0
    %1221 = vmatpush1.msra.mxu0 0.0
    %1222 = vmatprep.subr.mxu0 0.0
    %1223 = vmatpush1.msra.mxu0 0.0
    %1224 = vmatprep.subr.mxu0 0.0
    %1225 = vmatpush1.msra.mxu0 0.0
    %1226 = vmatprep.subr.mxu0 0.0
    %1227 = vmatpush1.msra.mxu0 0.0
    %1228 = vmatprep.mubr.f32.mxu0 0.0
    %1229 = vmatmul.mubr.f32.gmra.mrb[0].mxu0 %v1159
    %v1230 = vpop.f32.mrb[0].mxu0
    %v1231 = vadd.f32 0.0, %v1230
    %v1232 = vpop.f32.mrb[0].mxu0
    %1233 = vmatprep.mubr.f32.mxu0 0.0
    %1234 = vmatmul.mubr.f32.gmra.mrb[0].mxu0 %v1162
    %v1235 = vpop.f32.mrb[0].mxu0
    %v1236 = vadd.f32 0.0, %v1235
    %v1237 = vpop.f32.mrb[0].mxu0
    %1238 = vdwg.mxu0
    %v1240 = vsel %vm270, %v517, 0
    %v1243 = vsel %vm270, %v590, 0
    %1245 = vmatprep.subr.mxu0 0.0
    %1246 = vmatpush1.msra.mxu0 %v593
    %1247 = vmatprep.subr.mxu0 0.0
    %1248 = vmatpush1.msra.mxu0 0.0
    %1249 = vmatprep.subr.mxu0 0.0
    %1250 = vmatpush1.msra.mxu0 0.0
    %1251 = vmatprep.subr.mxu0 0.0
    %1252 = vmatpush1.msra.mxu0 0.0
    %1253 = vmatprep.subr.mxu0 0.0
    %1254 = vmatpush1.msra.mxu0 0.0
    %1255 = vmatprep.subr.mxu0 0.0
    %1256 = vmatpush1.msra.mxu0 0.0
    %1257 = vmatprep.subr.mxu0 0.0
    %1258 = vmatpush1.msra.mxu0 0.0
    %1259 = vmatprep.subr.mxu0 0.0
    %1260 = vmatpush1.msra.mxu0 0.0
    %1261 = vmatprep.subr.mxu0 0.0
    %1262 = vmatpush1.msra.mxu0 0.0
    %1263 = vmatprep.subr.mxu0 0.0
    %1264 = vmatpush1.msra.mxu0 0.0
    %1265 = vmatprep.subr.mxu0 0.0
    %1266 = vmatpush1.msra.mxu0 0.0
    %1267 = vmatprep.subr.mxu0 0.0
    %1268 = vmatpush1.msra.mxu0 0.0
    %1269 = vmatprep.subr.mxu0 0.0
    %1270 = vmatpush1.msra.mxu0 0.0
    %1271 = vmatprep.subr.mxu0 0.0
    %1272 = vmatpush1.msra.mxu0 0.0
    %1273 = vmatprep.subr.mxu0 0.0
    %1274 = vmatpush1.msra.mxu0 0.0
    %1275 = vmatprep.subr.mxu0 0.0
    %1276 = vmatpush1.msra.mxu0 0.0
    %1277 = vmatprep.subr.mxu0 0.0
    %1278 = vmatpush1.msra.mxu0 0.0
    %1279 = vmatprep.subr.mxu0 0.0
    %1280 = vmatpush1.msra.mxu0 0.0
    %1281 = vmatprep.subr.mxu0 0.0
    %1282 = vmatpush1.msra.mxu0 0.0
    %1283 = vmatprep.subr.mxu0 0.0
    %1284 = vmatpush1.msra.mxu0 0.0
    %1285 = vmatprep.subr.mxu0 0.0
    %1286 = vmatpush1.msra.mxu0 0.0
    %1287 = vmatprep.subr.mxu0 0.0
    %1288 = vmatpush1.msra.mxu0 0.0
    %1289 = vmatprep.subr.mxu0 0.0
    %1290 = vmatpush1.msra.mxu0 0.0
    %1291 = vmatprep.subr.mxu0 0.0
    %1292 = vmatpush1.msra.mxu0 0.0
    %1293 = vmatprep.subr.mxu0 0.0
    %1294 = vmatpush1.msra.mxu0 0.0
    %1295 = vmatprep.subr.mxu0 0.0
    %1296 = vmatpush1.msra.mxu0 0.0
    %1297 = vmatprep.subr.mxu0 0.0
    %1298 = vmatpush1.msra.mxu0 0.0
    %1299 = vmatprep.subr.mxu0 0.0
    %1300 = vmatpush1.msra.mxu0 0.0
    %1301 = vmatprep.subr.mxu0 0.0
    %1302 = vmatpush1.msra.mxu0 0.0
    %1303 = vmatprep.subr.mxu0 0.0
    %1304 = vmatpush1.msra.mxu0 0.0
    %1305 = vmatprep.subr.mxu0 0.0
    %1306 = vmatpush1.msra.mxu0 0.0
    %1307 = vmatprep.subr.mxu0 0.0
    %1308 = vmatpush1.msra.mxu0 0.0
    %1309 = vmatprep.mubr.f32.mxu0 0.0
    %1310 = vmatmul.mubr.f32.gmra.mrb[0].mxu0 %v1240
    %v1311 = vpop.f32.mrb[0].mxu0
    %v1312 = vadd.f32 %v1231, %v1311
    %v1313 = vpop.f32.mrb[0].mxu0
    %1314 = vmatprep.mubr.f32.mxu0 0.0
    %1315 = vmatmul.mubr.f32.gmra.mrb[0].mxu0 %v1243
    %v1316 = vpop.f32.mrb[0].mxu0
    %v1317 = vadd.f32 %v1236, %v1316
    %v1318 = vpop.f32.mrb[0].mxu0
    %1319 = vdwg.mxu0
    %s1320 = scalar_lea.vmem %s1, 64
    %v1321 = vld [vmem:[%s1320] sm:$0xff]
    %v1322 = vld [vmem:[%s1320 + $0x8] sm:$0xff]
    %v1323 = vld [vmem:[%s1320 + $0x10] sm:$0xff]
    %v1324 = vld [vmem:[%s1320 + $0x18] sm:$0xff]
    %1325 = vmatprep.subr.mxu0 0.0
    %1326 = vmatpush1.msra.mxu0 %v1321
    %1327 = vmatprep.subr.mxu0 0.0
    %1328 = vmatpush1.msra.mxu0 %v1322
    %1329 = vmatprep.subr.mxu0 0.0
    %1330 = vmatpush1.msra.mxu0 %v1323
    %1331 = vmatprep.subr.mxu0 0.0
    %1332 = vmatpush1.msra.mxu0 %v1324
    %1333 = vmatprep.subr.mxu0 0.0
    %1334 = vmatpush1.msra.mxu0 0.0
    %1335 = vmatprep.subr.mxu0 0.0
    %1336 = vmatpush1.msra.mxu0 0.0
    %1337 = vmatprep.subr.mxu0 0.0
    %1338 = vmatpush1.msra.mxu0 0.0
    %1339 = vmatprep.subr.mxu0 0.0
    %1340 = vmatpush1.msra.mxu0 0.0
    %1341 = vmatprep.subr.mxu0 0.0
    %1342 = vmatpush1.msra.mxu0 0.0
    %1343 = vmatprep.subr.mxu0 0.0
    %1344 = vmatpush1.msra.mxu0 0.0
    %1345 = vmatprep.subr.mxu0 0.0
    %1346 = vmatpush1.msra.mxu0 0.0
    %1347 = vmatprep.subr.mxu0 0.0
    %1348 = vmatpush1.msra.mxu0 0.0
    %1349 = vmatprep.subr.mxu0 0.0
    %1350 = vmatpush1.msra.mxu0 0.0
    %1351 = vmatprep.subr.mxu0 0.0
    %1352 = vmatpush1.msra.mxu0 0.0
    %1353 = vmatprep.subr.mxu0 0.0
    %1354 = vmatpush1.msra.mxu0 0.0
    %1355 = vmatprep.subr.mxu0 0.0
    %1356 = vmatpush1.msra.mxu0 0.0
    %1357 = vmatprep.subr.mxu0 0.0
    %1358 = vmatpush1.msra.mxu0 0.0
    %1359 = vmatprep.subr.mxu0 0.0
    %1360 = vmatpush1.msra.mxu0 0.0
    %1361 = vmatprep.subr.mxu0 0.0
    %1362 = vmatpush1.msra.mxu0 0.0
    %1363 = vmatprep.subr.mxu0 0.0
    %1364 = vmatpush1.msra.mxu0 0.0
    %1365 = vmatprep.subr.mxu0 0.0
    %1366 = vmatpush1.msra.mxu0 0.0
    %1367 = vmatprep.subr.mxu0 0.0
    %1368 = vmatpush1.msra.mxu0 0.0
    %1369 = vmatprep.subr.mxu0 0.0
    %1370 = vmatpush1.msra.mxu0 0.0
    %1371 = vmatprep.subr.mxu0 0.0
    %1372 = vmatpush1.msra.mxu0 0.0
    %1373 = vmatprep.subr.mxu0 0.0
    %1374 = vmatpush1.msra.mxu0 0.0
    %1375 = vmatprep.subr.mxu0 0.0
    %1376 = vmatpush1.msra.mxu0 0.0
    %1377 = vmatprep.subr.mxu0 0.0
    %1378 = vmatpush1.msra.mxu0 0.0
    %1379 = vmatprep.subr.mxu0 0.0
    %1380 = vmatpush1.msra.mxu0 0.0
    %1381 = vmatprep.subr.mxu0 0.0
    %1382 = vmatpush1.msra.mxu0 0.0
    %1383 = vmatprep.subr.mxu0 0.0
    %1384 = vmatpush1.msra.mxu0 0.0
    %1385 = vmatprep.subr.mxu0 0.0
    %1386 = vmatpush1.msra.mxu0 0.0
    %1387 = vmatprep.subr.mxu0 0.0
    %1388 = vmatpush1.msra.mxu0 0.0
    %1389 = vmatprep.mubr.f32.mxu0 0.0
    %1390 = vmatmul.mubr.f32.gmra.mrb[0].mxu0 %v32
    %v1391 = vpop.f32.mrb[0].mxu0
    %v1392 = vadd.f32 0.0, %v1391
    %v1393 = vpop.f32.mrb[0].mxu0
    %1394 = vmatprep.mubr.f32.mxu0 0.0
    %1395 = vmatmul.mubr.f32.gmra.mrb[0].mxu0 %v35
    %v1396 = vpop.f32.mrb[0].mxu0
    %v1397 = vadd.f32 0.0, %v1396
    %v1398 = vpop.f32.mrb[0].mxu0
    %1399 = vdwg.mxu0
    %s1400 = scalar_lea.vmem %s2, 64
    %v1401 = vld [vmem:[%s1400] sm:$0xff]
    %v1402 = vld [vmem:[%s1400 + $0x8] sm:$0xff]
    %v1403 = vld [vmem:[%s1400 + $0x10] sm:$0xff]
    %v1404 = vld [vmem:[%s1400 + $0x18] sm:$0xff]
    %1405 = vmatprep.subr.mxu0 0.0
    %1406 = vmatpush1.msra.mxu0 %v1401
    %1407 = vmatprep.subr.mxu0 0.0
    %1408 = vmatpush1.msra.mxu0 %v1402
    %1409 = vmatprep.subr.mxu0 0.0
    %1410 = vmatpush1.msra.mxu0 %v1403
    %1411 = vmatprep.subr.mxu0 0.0
    %1412 = vmatpush1.msra.mxu0 %v1404
    %1413 = vmatprep.subr.mxu0 0.0
    %1414 = vmatpush1.msra.mxu0 0.0
    %1415 = vmatprep.subr.mxu0 0.0
    %1416 = vmatpush1.msra.mxu0 0.0
    %1417 = vmatprep.subr.mxu0 0.0
    %1418 = vmatpush1.msra.mxu0 0.0
    %1419 = vmatprep.subr.mxu0 0.0
    %1420 = vmatpush1.msra.mxu0 0.0
    %1421 = vmatprep.subr.mxu0 0.0
    %1422 = vmatpush1.msra.mxu0 0.0
    %1423 = vmatprep.subr.mxu0 0.0
    %1424 = vmatpush1.msra.mxu0 0.0
    %1425 = vmatprep.subr.mxu0 0.0
    %1426 = vmatpush1.msra.mxu0 0.0
    %1427 = vmatprep.subr.mxu0 0.0
    %1428 = vmatpush1.msra.mxu0 0.0
    %1429 = vmatprep.subr.mxu0 0.0
    %1430 = vmatpush1.msra.mxu0 0.0
    %1431 = vmatprep.subr.mxu0 0.0
    %1432 = vmatpush1.msra.mxu0 0.0
    %1433 = vmatprep.subr.mxu0 0.0
    %1434 = vmatpush1.msra.mxu0 0.0
    %1435 = vmatprep.subr.mxu0 0.0
    %1436 = vmatpush1.msra.mxu0 0.0
    %1437 = vmatprep.subr.mxu0 0.0
    %1438 = vmatpush1.msra.mxu0 0.0
    %1439 = vmatprep.subr.mxu0 0.0
    %1440 = vmatpush1.msra.mxu0 0.0
    %1441 = vmatprep.subr.mxu0 0.0
    %1442 = vmatpush1.msra.mxu0 0.0
    %1443 = vmatprep.subr.mxu0 0.0
    %1444 = vmatpush1.msra.mxu0 0.0
    %1445 = vmatprep.subr.mxu0 0.0
    %1446 = vmatpush1.msra.mxu0 0.0
    %1447 = vmatprep.subr.mxu0 0.0
    %1448 = vmatpush1.msra.mxu0 0.0
    %1449 = vmatprep.subr.mxu0 0.0
    %1450 = vmatpush1.msra.mxu0 0.0
    %1451 = vmatprep.subr.mxu0 0.0
    %1452 = vmatpush1.msra.mxu0 0.0
    %1453 = vmatprep.subr.mxu0 0.0
    %1454 = vmatpush1.msra.mxu0 0.0
    %1455 = vmatprep.subr.mxu0 0.0
    %1456 = vmatpush1.msra.mxu0 0.0
    %1457 = vmatprep.subr.mxu0 0.0
    %1458 = vmatpush1.msra.mxu0 0.0
    %1459 = vmatprep.subr.mxu0 0.0
    %1460 = vmatpush1.msra.mxu0 0.0
    %1461 = vmatprep.subr.mxu0 0.0
    %1462 = vmatpush1.msra.mxu0 0.0
    %1463 = vmatprep.subr.mxu0 0.0
    %1464 = vmatpush1.msra.mxu0 0.0
    %1465 = vmatprep.subr.mxu0 0.0
    %1466 = vmatpush1.msra.mxu0 0.0
    %1467 = vmatprep.subr.mxu0 0.0
    %1468 = vmatpush1.msra.mxu0 0.0
    %1469 = vmatprep.mubr.f32.mxu0 0.0
    %1470 = vmatmul.mubr.f32.gmra.mrb[0].mxu0 %v32
    %v1471 = vpop.f32.mrb[0].mxu0
    %v1472 = vadd.f32 0.0, %v1471
    %v1473 = vpop.f32.mrb[0].mxu0
    %1474 = vmatprep.mubr.f32.mxu0 0.0
    %1475 = vmatmul.mubr.f32.gmra.mrb[0].mxu0 %v35
    %v1476 = vpop.f32.mrb[0].mxu0
    %v1477 = vadd.f32 0.0, %v1476
    %v1478 = vpop.f32.mrb[0].mxu0
    %1479 = vdwg.mxu0
    %s1480 = scalar_lea.vmem %s3, 64
    %v1481 = vld [vmem:[%s1480] sm:$0xff]
    %v1482 = vld [vmem:[%s1480 + $0x8] sm:$0xff]
    %v1483 = vld [vmem:[%s1480 + $0x10] sm:$0xff]
    %v1484 = vld [vmem:[%s1480 + $0x18] sm:$0xff]
    %1485 = vmatprep.subr.mxu0 0.0
    %1486 = vmatpush1.msra.mxu0 %v1481
    %1487 = vmatprep.subr.mxu0 0.0
    %1488 = vmatpush1.msra.mxu0 %v1482
    %1489 = vmatprep.subr.mxu0 0.0
    %1490 = vmatpush1.msra.mxu0 %v1483
    %1491 = vmatprep.subr.mxu0 0.0
    %1492 = vmatpush1.msra.mxu0 %v1484
    %1493 = vmatprep.subr.mxu0 0.0
    %1494 = vmatpush1.msra.mxu0 0.0
    %1495 = vmatprep.subr.mxu0 0.0
    %1496 = vmatpush1.msra.mxu0 0.0
    %1497 = vmatprep.subr.mxu0 0.0
    %1498 = vmatpush1.msra.mxu0 0.0
    %1499 = vmatprep.subr.mxu0 0.0
    %1500 = vmatpush1.msra.mxu0 0.0
    %1501 = vmatprep.subr.mxu0 0.0
    %1502 = vmatpush1.msra.mxu0 0.0
    %1503 = vmatprep.subr.mxu0 0.0
    %1504 = vmatpush1.msra.mxu0 0.0
    %1505 = vmatprep.subr.mxu0 0.0
    %1506 = vmatpush1.msra.mxu0 0.0
    %1507 = vmatprep.subr.mxu0 0.0
    %1508 = vmatpush1.msra.mxu0 0.0
    %1509 = vmatprep.subr.mxu0 0.0
    %1510 = vmatpush1.msra.mxu0 0.0
    %1511 = vmatprep.subr.mxu0 0.0
    %1512 = vmatpush1.msra.mxu0 0.0
    %1513 = vmatprep.subr.mxu0 0.0
    %1514 = vmatpush1.msra.mxu0 0.0
    %1515 = vmatprep.subr.mxu0 0.0
    %1516 = vmatpush1.msra.mxu0 0.0
    %1517 = vmatprep.subr.mxu0 0.0
    %1518 = vmatpush1.msra.mxu0 0.0
    %1519 = vmatprep.subr.mxu0 0.0
    %1520 = vmatpush1.msra.mxu0 0.0
    %1521 = vmatprep.subr.mxu0 0.0
    %1522 = vmatpush1.msra.mxu0 0.0
    %1523 = vmatprep.subr.mxu0 0.0
    %1524 = vmatpush1.msra.mxu0 0.0
    %1525 = vmatprep.subr.mxu0 0.0
    %1526 = vmatpush1.msra.mxu0 0.0
    %1527 = vmatprep.subr.mxu0 0.0
    %1528 = vmatpush1.msra.mxu0 0.0
    %1529 = vmatprep.subr.mxu0 0.0
    %1530 = vmatpush1.msra.mxu0 0.0
    %1531 = vmatprep.subr.mxu0 0.0
    %1532 = vmatpush1.msra.mxu0 0.0
    %1533 = vmatprep.subr.mxu0 0.0
    %1534 = vmatpush1.msra.mxu0 0.0
    %1535 = vmatprep.subr.mxu0 0.0
    %1536 = vmatpush1.msra.mxu0 0.0
    %1537 = vmatprep.subr.mxu0 0.0
    %1538 = vmatpush1.msra.mxu0 0.0
    %1539 = vmatprep.subr.mxu0 0.0
    %1540 = vmatpush1.msra.mxu0 0.0
    %1541 = vmatprep.subr.mxu0 0.0
    %1542 = vmatpush1.msra.mxu0 0.0
    %1543 = vmatprep.subr.mxu0 0.0
    %1544 = vmatpush1.msra.mxu0 0.0
    %1545 = vmatprep.subr.mxu0 0.0
    %1546 = vmatpush1.msra.mxu0 0.0
    %1547 = vmatprep.subr.mxu0 0.0
    %1548 = vmatpush1.msra.mxu0 0.0
    %1549 = vmatprep.mubr.f32.mxu0 0.0
    %1550 = vmatmul.mubr.f32.gmra.mrb[0].mxu0 %v32
    %v1551 = vpop.f32.mrb[0].mxu0
    %v1552 = vadd.f32 0.0, %v1551
    %v1553 = vpop.f32.mrb[0].mxu0
    %1554 = vmatprep.mubr.f32.mxu0 0.0
    %1555 = vmatmul.mubr.f32.gmra.mrb[0].mxu0 %v35
    %v1556 = vpop.f32.mrb[0].mxu0
    %v1557 = vadd.f32 0.0, %v1556
    %v1558 = vpop.f32.mrb[0].mxu0
    %1559 = vdwg.mxu0
    %v1561 = vsel %vm270, %v1392, 0
    %v1564 = vsel %vm270, %v1472, 0
    %1566 = vmatprep.subr.mxu0 0.0
    %1567 = vmatpush1.xpose.msra.mxu0 %v1564
    %1568 = vmatprep.subr.mxu0 0.0
    %1569 = vmatpush1.xpose.msra.mxu0 0.0
    %1570 = vmatprep.subr.mxu0 0.0
    %1571 = vmatpush1.xpose.msra.mxu0 0.0
    %1572 = vmatprep.subr.mxu0 0.0
    %1573 = vmatpush1.xpose.msra.mxu0 0.0
    %1574 = vmatprep.subr.mxu0 0.0
    %1575 = vmatpush1.xpose.msra.mxu0 0.0
    %1576 = vmatprep.subr.mxu0 0.0
    %1577 = vmatpush1.xpose.msra.mxu0 0.0
    %1578 = vmatprep.subr.mxu0 0.0
    %1579 = vmatpush1.xpose.msra.mxu0 0.0
    %1580 = vmatprep.subr.mxu0 0.0
    %1581 = vmatpush1.xpose.msra.mxu0 0.0
    %1582 = vmatprep.subr.mxu0 0.0
    %1583 = vmatpush1.xpose.msra.mxu0 0.0
    %1584 = vmatprep.subr.mxu0 0.0
    %1585 = vmatpush1.xpose.msra.mxu0 0.0
    %1586 = vmatprep.subr.mxu0 0.0
    %1587 = vmatpush1.xpose.msra.mxu0 0.0
    %1588 = vmatprep.subr.mxu0 0.0
    %1589 = vmatpush1.xpose.msra.mxu0 0.0
    %1590 = vmatprep.subr.mxu0 0.0
    %1591 = vmatpush1.xpose.msra.mxu0 0.0
    %1592 = vmatprep.subr.mxu0 0.0
    %1593 = vmatpush1.xpose.msra.mxu0 0.0
    %1594 = vmatprep.subr.mxu0 0.0
    %1595 = vmatpush1.xpose.msra.mxu0 0.0
    %1596 = vmatprep.subr.mxu0 0.0
    %1597 = vmatpush1.xpose.msra.mxu0 0.0
    %1598 = vmatprep.subr.mxu0 0.0
    %1599 = vmatpush1.xpose.msra.mxu0 0.0
    %1600 = vmatprep.subr.mxu0 0.0
    %1601 = vmatpush1.xpose.msra.mxu0 0.0
    %1602 = vmatprep.subr.mxu0 0.0
    %1603 = vmatpush1.xpose.msra.mxu0 0.0
    %1604 = vmatprep.subr.mxu0 0.0
    %1605 = vmatpush1.xpose.msra.mxu0 0.0
    %1606 = vmatprep.subr.mxu0 0.0
    %1607 = vmatpush1.xpose.msra.mxu0 0.0
    %1608 = vmatprep.subr.mxu0 0.0
    %1609 = vmatpush1.xpose.msra.mxu0 0.0
    %1610 = vmatprep.subr.mxu0 0.0
    %1611 = vmatpush1.xpose.msra.mxu0 0.0
    %1612 = vmatprep.subr.mxu0 0.0
    %1613 = vmatpush1.xpose.msra.mxu0 0.0
    %1614 = vmatprep.subr.mxu0 0.0
    %1615 = vmatpush1.xpose.msra.mxu0 0.0
    %1616 = vmatprep.subr.mxu0 0.0
    %1617 = vmatpush1.xpose.msra.mxu0 0.0
    %1618 = vmatprep.subr.mxu0 0.0
    %1619 = vmatpush1.xpose.msra.mxu0 0.0
    %1620 = vmatprep.subr.mxu0 0.0
    %1621 = vmatpush1.xpose.msra.mxu0 0.0
    %1622 = vmatprep.subr.mxu0 0.0
    %1623 = vmatpush1.xpose.msra.mxu0 0.0
    %1624 = vmatprep.subr.mxu0 0.0
    %1625 = vmatpush1.xpose.msra.mxu0 0.0
    %1626 = vmatprep.subr.mxu0 0.0
    %1627 = vmatpush1.xpose.msra.mxu0 0.0
    %1628 = vmatprep.subr.mxu0 0.0
    %1629 = vmatpush1.xpose.msra.mxu0 0.0
    %1630 = vmatprep.mubr.f32.mxu0 0.0
    %1631 = vmatmul.mubr.f32.gmra.mrb[0].mxu0 %v1561
    %v1632 = vpop.f32.mrb[0].mxu0
    %v1633 = vadd.f32 0.0, %v1632
    %v1634 = vpop.f32.mrb[0].mxu0
    %1635 = vdwg.mxu0
    %v1637 = vsel %vm270, %v1397, 0
    %v1640 = vsel %vm270, %v1477, 0
    %1642 = vmatprep.subr.mxu0 0.0
    %1643 = vmatpush1.xpose.msra.mxu0 %v1640
    %1644 = vmatprep.subr.mxu0 0.0
    %1645 = vmatpush1.xpose.msra.mxu0 0.0
    %1646 = vmatprep.subr.mxu0 0.0
    %1647 = vmatpush1.xpose.msra.mxu0 0.0
    %1648 = vmatprep.subr.mxu0 0.0
    %1649 = vmatpush1.xpose.msra.mxu0 0.0
    %1650 = vmatprep.subr.mxu0 0.0
    %1651 = vmatpush1.xpose.msra.mxu0 0.0
    %1652 = vmatprep.subr.mxu0 0.0
    %1653 = vmatpush1.xpose.msra.mxu0 0.0
    %1654 = vmatprep.subr.mxu0 0.0
    %1655 = vmatpush1.xpose.msra.mxu0 0.0
    %1656 = vmatprep.subr.mxu0 0.0
    %1657 = vmatpush1.xpose.msra.mxu0 0.0
    %1658 = vmatprep.subr.mxu0 0.0
    %1659 = vmatpush1.xpose.msra.mxu0 0.0
    %1660 = vmatprep.subr.mxu0 0.0
    %1661 = vmatpush1.xpose.msra.mxu0 0.0
    %1662 = vmatprep.subr.mxu0 0.0
    %1663 = vmatpush1.xpose.msra.mxu0 0.0
    %1664 = vmatprep.subr.mxu0 0.0
    %1665 = vmatpush1.xpose.msra.mxu0 0.0
    %1666 = vmatprep.subr.mxu0 0.0
    %1667 = vmatpush1.xpose.msra.mxu0 0.0
    %1668 = vmatprep.subr.mxu0 0.0
    %1669 = vmatpush1.xpose.msra.mxu0 0.0
    %1670 = vmatprep.subr.mxu0 0.0
    %1671 = vmatpush1.xpose.msra.mxu0 0.0
    %1672 = vmatprep.subr.mxu0 0.0
    %1673 = vmatpush1.xpose.msra.mxu0 0.0
    %1674 = vmatprep.subr.mxu0 0.0
    %1675 = vmatpush1.xpose.msra.mxu0 0.0
    %1676 = vmatprep.subr.mxu0 0.0
    %1677 = vmatpush1.xpose.msra.mxu0 0.0
    %1678 = vmatprep.subr.mxu0 0.0
    %1679 = vmatpush1.xpose.msra.mxu0 0.0
    %1680 = vmatprep.subr.mxu0 0.0
    %1681 = vmatpush1.xpose.msra.mxu0 0.0
    %1682 = vmatprep.subr.mxu0 0.0
    %1683 = vmatpush1.xpose.msra.mxu0 0.0
    %1684 = vmatprep.subr.mxu0 0.0
    %1685 = vmatpush1.xpose.msra.mxu0 0.0
    %1686 = vmatprep.subr.mxu0 0.0
    %1687 = vmatpush1.xpose.msra.mxu0 0.0
    %1688 = vmatprep.subr.mxu0 0.0
    %1689 = vmatpush1.xpose.msra.mxu0 0.0
    %1690 = vmatprep.subr.mxu0 0.0
    %1691 = vmatpush1.xpose.msra.mxu0 0.0
    %1692 = vmatprep.subr.mxu0 0.0
    %1693 = vmatpush1.xpose.msra.mxu0 0.0
    %1694 = vmatprep.subr.mxu0 0.0
    %1695 = vmatpush1.xpose.msra.mxu0 0.0
    %1696 = vmatprep.subr.mxu0 0.0
    %1697 = vmatpush1.xpose.msra.mxu0 0.0
    %1698 = vmatprep.subr.mxu0 0.0
    %1699 = vmatpush1.xpose.msra.mxu0 0.0
    %1700 = vmatprep.subr.mxu0 0.0
    %1701 = vmatpush1.xpose.msra.mxu0 0.0
    %1702 = vmatprep.subr.mxu0 0.0
    %1703 = vmatpush1.xpose.msra.mxu0 0.0
    %1704 = vmatprep.subr.mxu0 0.0
    %1705 = vmatpush1.xpose.msra.mxu0 0.0
    %1706 = vmatprep.mubr.f32.mxu0 0.0
    %1707 = vmatmul.mubr.f32.gmra.mrb[0].mxu0 %v1637
    %v1708 = vpop.f32.mrb[0].mxu0
    %v1709 = vadd.f32 0.0, %v1708
    %v1710 = vpop.f32.mrb[0].mxu0
    %1711 = vdwg.mxu0
    %v1712 = vmul.f32 %v1633, 0.35355338
    %v1713 = vmul.f32 %v1709, 0.35355338
    %v1714 = vsel %vm270, %v1712, -inf
    %1715 = vmax.xlane.f32.xlu0 %v1714
    %v1716 = vpop.xlane.xlu0 %1715
    %v1717 = vsel %vm270, %v1713, -inf
    %1718 = vmax.xlane.f32.xlu0 %v1717
    %v1719 = vpop.xlane.xlu0 %1718
    %v1720 = vsub.f32 %v1712, %v1716
    %v1721 = vsub.f32 %v1713, %v1719
    %v1722 = vmul.f32 %v1720, 1.442695
    %v1723 = vpow.pop %v1722
    %v1724 = vmul.f32 %v1721, 1.442695
    %v1725 = vpow.pop %v1724
    %v1726 = vsel %vm270, %v1723, 0.0
    %1727 = vadd.xlane.f32.xlu0 %v1726
    %v1728 = vpop.xlane.xlu0 %1727
    %v1729 = vsel %vm270, %v1725, 0.0
    %1730 = vadd.xlane.f32.xlu0 %v1729
    %v1731 = vpop.xlane.xlu0 %1730
    %v1732 = vrcp.pop %v1728
    %v1733 = vrcp.pop %v1731
    %v1734 = vmul.f32 %v1723, %v1732
    %v1735 = vmul.f32 %v1725, %v1733
    %v1737 = vsel %vm270, %v1734, 0
    %1739 = vmatprep.subr.mxu0 0.0
    %1740 = vmatpush1.msra.mxu0 %v1552
    %1741 = vmatprep.subr.mxu0 0.0
    %1742 = vmatpush1.msra.mxu0 0.0
    %1743 = vmatprep.subr.mxu0 0.0
    %1744 = vmatpush1.msra.mxu0 0.0
    %1745 = vmatprep.subr.mxu0 0.0
    %1746 = vmatpush1.msra.mxu0 0.0
    %1747 = vmatprep.subr.mxu0 0.0
    %1748 = vmatpush1.msra.mxu0 0.0
    %1749 = vmatprep.subr.mxu0 0.0
    %1750 = vmatpush1.msra.mxu0 0.0
    %1751 = vmatprep.subr.mxu0 0.0
    %1752 = vmatpush1.msra.mxu0 0.0
    %1753 = vmatprep.subr.mxu0 0.0
    %1754 = vmatpush1.msra.mxu0 0.0
    %1755 = vmatprep.subr.mxu0 0.0
    %1756 = vmatpush1.msra.mxu0 0.0
    %1757 = vmatprep.subr.mxu0 0.0
    %1758 = vmatpush1.msra.mxu0 0.0
    %1759 = vmatprep.subr.mxu0 0.0
    %1760 = vmatpush1.msra.mxu0 0.0
    %1761 = vmatprep.subr.mxu0 0.0
    %1762 = vmatpush1.msra.mxu0 0.0
    %1763 = vmatprep.subr.mxu0 0.0
    %1764 = vmatpush1.msra.mxu0 0.0
    %1765 = vmatprep.subr.mxu0 0.0
    %1766 = vmatpush1.msra.mxu0 0.0
    %1767 = vmatprep.subr.mxu0 0.0
    %1768 = vmatpush1.msra.mxu0 0.0
    %1769 = vmatprep.subr.mxu0 0.0
    %1770 = vmatpush1.msra.mxu0 0.0
    %1771 = vmatprep.subr.mxu0 0.0
    %1772 = vmatpush1.msra.mxu0 0.0
    %1773 = vmatprep.subr.mxu0 0.0
    %1774 = vmatpush1.msra.mxu0 0.0
    %1775 = vmatprep.subr.mxu0 0.0
    %1776 = vmatpush1.msra.mxu0 0.0
    %1777 = vmatprep.subr.mxu0 0.0
    %1778 = vmatpush1.msra.mxu0 0.0
    %1779 = vmatprep.subr.mxu0 0.0
    %1780 = vmatpush1.msra.mxu0 0.0
    %1781 = vmatprep.subr.mxu0 0.0
    %1782 = vmatpush1.msra.mxu0 0.0
    %1783 = vmatprep.subr.mxu0 0.0
    %1784 = vmatpush1.msra.mxu0 0.0
    %1785 = vmatprep.subr.mxu0 0.0
    %1786 = vmatpush1.msra.mxu0 0.0
    %1787 = vmatprep.subr.mxu0 0.0
    %1788 = vmatpush1.msra.mxu0 0.0
    %1789 = vmatprep.subr.mxu0 0.0
    %1790 = vmatpush1.msra.mxu0 0.0
    %1791 = vmatprep.subr.mxu0 0.0
    %1792 = vmatpush1.msra.mxu0 0.0
    %1793 = vmatprep.subr.mxu0 0.0
    %1794 = vmatpush1.msra.mxu0 0.0
    %1795 = vmatprep.subr.mxu0 0.0
    %1796 = vmatpush1.msra.mxu0 0.0
    %1797 = vmatprep.subr.mxu0 0.0
    %1798 = vmatpush1.msra.mxu0 0.0
    %1799 = vmatprep.subr.mxu0 0.0
    %1800 = vmatpush1.msra.mxu0 0.0
    %1801 = vmatprep.subr.mxu0 0.0
    %1802 = vmatpush1.msra.mxu0 0.0
    %1803 = vmatprep.mubr.f32.mxu0 0.0
    %1804 = vmatmul.mubr.f32.gmra.mrb[0].mxu0 %v1737
    %v1805 = vpop.f32.mrb[0].mxu0
    %v1806 = vadd.f32 0.0, %v1805
    %v1807 = vpop.f32.mrb[0].mxu0
    %1808 = vdwg.mxu0
    %v1810 = vsel %vm270, %v1735, 0
    %1812 = vmatprep.subr.mxu0 0.0
    %1813 = vmatpush1.msra.mxu0 %v1557
    %1814 = vmatprep.subr.mxu0 0.0
    %1815 = vmatpush1.msra.mxu0 0.0
    %1816 = vmatprep.subr.mxu0 0.0
    %1817 = vmatpush1.msra.mxu0 0.0
    %1818 = vmatprep.subr.mxu0 0.0
    %1819 = vmatpush1.msra.mxu0 0.0
    %1820 = vmatprep.subr.mxu0 0.0
    %1821 = vmatpush1.msra.mxu0 0.0
    %1822 = vmatprep.subr.mxu0 0.0
    %1823 = vmatpush1.msra.mxu0 0.0
    %1824 = vmatprep.subr.mxu0 0.0
    %1825 = vmatpush1.msra.mxu0 0.0
    %1826 = vmatprep.subr.mxu0 0.0
    %1827 = vmatpush1.msra.mxu0 0.0
    %1828 = vmatprep.subr.mxu0 0.0
    %1829 = vmatpush1.msra.mxu0 0.0
    %1830 = vmatprep.subr.mxu0 0.0
    %1831 = vmatpush1.msra.mxu0 0.0
    %1832 = vmatprep.subr.mxu0 0.0
    %1833 = vmatpush1.msra.mxu0 0.0
    %1834 = vmatprep.subr.mxu0 0.0
    %1835 = vmatpush1.msra.mxu0 0.0
    %1836 = vmatprep.subr.mxu0 0.0
    %1837 = vmatpush1.msra.mxu0 0.0
    %1838 = vmatprep.subr.mxu0 0.0
    %1839 = vmatpush1.msra.mxu0 0.0
    %1840 = vmatprep.subr.mxu0 0.0
    %1841 = vmatpush1.msra.mxu0 0.0
    %1842 = vmatprep.subr.mxu0 0.0
    %1843 = vmatpush1.msra.mxu0 0.0
    %1844 = vmatprep.subr.mxu0 0.0
    %1845 = vmatpush1.msra.mxu0 0.0
    %1846 = vmatprep.subr.mxu0 0.0
    %1847 = vmatpush1.msra.mxu0 0.0
    %1848 = vmatprep.subr.mxu0 0.0
    %1849 = vmatpush1.msra.mxu0 0.0
    %1850 = vmatprep.subr.mxu0 0.0
    %1851 = vmatpush1.msra.mxu0 0.0
    %1852 = vmatprep.subr.mxu0 0.0
    %1853 = vmatpush1.msra.mxu0 0.0
    %1854 = vmatprep.subr.mxu0 0.0
    %1855 = vmatpush1.msra.mxu0 0.0
    %1856 = vmatprep.subr.mxu0 0.0
    %1857 = vmatpush1.msra.mxu0 0.0
    %1858 = vmatprep.subr.mxu0 0.0
    %1859 = vmatpush1.msra.mxu0 0.0
    %1860 = vmatprep.subr.mxu0 0.0
    %1861 = vmatpush1.msra.mxu0 0.0
    %1862 = vmatprep.subr.mxu0 0.0
    %1863 = vmatpush1.msra.mxu0 0.0
    %1864 = vmatprep.subr.mxu0 0.0
    %1865 = vmatpush1.msra.mxu0 0.0
    %1866 = vmatprep.subr.mxu0 0.0
    %1867 = vmatpush1.msra.mxu0 0.0
    %1868 = vmatprep.subr.mxu0 0.0
    %1869 = vmatpush1.msra.mxu0 0.0
    %1870 = vmatprep.subr.mxu0 0.0
    %1871 = vmatpush1.msra.mxu0 0.0
    %1872 = vmatprep.subr.mxu0 0.0
    %1873 = vmatpush1.msra.mxu0 0.0
    %1874 = vmatprep.subr.mxu0 0.0
    %1875 = vmatpush1.msra.mxu0 0.0
    %1876 = vmatprep.mubr.f32.mxu0 0.0
    %1877 = vmatmul.mubr.f32.gmra.mrb[0].mxu0 %v1810
    %v1878 = vpop.f32.mrb[0].mxu0
    %v1879 = vadd.f32 0.0, %v1878
    %v1880 = vpop.f32.mrb[0].mxu0
    %1881 = vdwg.mxu0
    %s1882 = scalar_lea.vmem %s4, 16
    %v1883 = vld [vmem:[%s1882] sm:$0xff]
    %v1885 = vsel %vm270, %v1806, 0
    %v1888 = vsel %vm270, %v1879, 0
    %1890 = vmatprep.subr.mxu0 0.0
    %1891 = vmatpush1.msra.mxu0 %v1883
    %1892 = vmatprep.subr.mxu0 0.0
    %1893 = vmatpush1.msra.mxu0 0.0
    %1894 = vmatprep.subr.mxu0 0.0
    %1895 = vmatpush1.msra.mxu0 0.0
    %1896 = vmatprep.subr.mxu0 0.0
    %1897 = vmatpush1.msra.mxu0 0.0
    %1898 = vmatprep.subr.mxu0 0.0
    %1899 = vmatpush1.msra.mxu0 0.0
    %1900 = vmatprep.subr.mxu0 0.0
    %1901 = vmatpush1.msra.mxu0 0.0
    %1902 = vmatprep.subr.mxu0 0.0
    %1903 = vmatpush1.msra.mxu0 0.0
    %1904 = vmatprep.subr.mxu0 0.0
    %1905 = vmatpush1.msra.mxu0 0.0
    %1906 = vmatprep.subr.mxu0 0.0
    %1907 = vmatpush1.msra.mxu0 0.0
    %1908 = vmatprep.subr.mxu0 0.0
    %1909 = vmatpush1.msra.mxu0 0.0
    %1910 = vmatprep.subr.mxu0 0.0
    %1911 = vmatpush1.msra.mxu0 0.0
    %1912 = vmatprep.subr.mxu0 0.0
    %1913 = vmatpush1.msra.mxu0 0.0
    %1914 = vmatprep.subr.mxu0 0.0
    %1915 = vmatpush1.msra.mxu0 0.0
    %1916 = vmatprep.subr.mxu0 0.0
    %1917 = vmatpush1.msra.mxu0 0.0
    %1918 = vmatprep.subr.mxu0 0.0
    %1919 = vmatpush1.msra.mxu0 0.0
    %1920 = vmatprep.subr.mxu0 0.0
    %1921 = vmatpush1.msra.mxu0 0.0
    %1922 = vmatprep.subr.mxu0 0.0
    %1923 = vmatpush1.msra.mxu0 0.0
    %1924 = vmatprep.subr.mxu0 0.0
    %1925 = vmatpush1.msra.mxu0 0.0
    %1926 = vmatprep.subr.mxu0 0.0
    %1927 = vmatpush1.msra.mxu0 0.0
    %1928 = vmatprep.subr.mxu0 0.0
    %1929 = vmatpush1.msra.mxu0 0.0
    %1930 = vmatprep.subr.mxu0 0.0
    %1931 = vmatpush1.msra.mxu0 0.0
    %1932 = vmatprep.subr.mxu0 0.0
    %1933 = vmatpush1.msra.mxu0 0.0
    %1934 = vmatprep.subr.mxu0 0.0
    %1935 = vmatpush1.msra.mxu0 0.0
    %1936 = vmatprep.subr.mxu0 0.0
    %1937 = vmatpush1.msra.mxu0 0.0
    %1938 = vmatprep.subr.mxu0 0.0
    %1939 = vmatpush1.msra.mxu0 0.0
    %1940 = vmatprep.subr.mxu0 0.0
    %1941 = vmatpush1.msra.mxu0 0.0
    %1942 = vmatprep.subr.mxu0 0.0
    %1943 = vmatpush1.msra.mxu0 0.0
    %1944 = vmatprep.subr.mxu0 0.0
    %1945 = vmatpush1.msra.mxu0 0.0
    %1946 = vmatprep.subr.mxu0 0.0
    %1947 = vmatpush1.msra.mxu0 0.0
    %1948 = vmatprep.subr.mxu0 0.0
    %1949 = vmatpush1.msra.mxu0 0.0
    %1950 = vmatprep.subr.mxu0 0.0
    %1951 = vmatpush1.msra.mxu0 0.0
    %1952 = vmatprep.subr.mxu0 0.0
    %1953 = vmatpush1.msra.mxu0 0.0
    %1954 = vmatprep.mubr.f32.mxu0 0.0
    %1955 = vmatmul.mubr.f32.gmra.mrb[0].mxu0 %v1885
    %v1956 = vpop.f32.mrb[0].mxu0
    %v1957 = vadd.f32 0.0, %v1956
    %v1958 = vpop.f32.mrb[0].mxu0
    %1959 = vmatprep.mubr.f32.mxu0 0.0
    %1960 = vmatmul.mubr.f32.gmra.mrb[0].mxu0 %v1888
    %v1961 = vpop.f32.mrb[0].mxu0
    %v1962 = vadd.f32 0.0, %v1961
    %v1963 = vpop.f32.mrb[0].mxu0
    %1964 = vdwg.mxu0
    %v1965 = vadd.f32 %v1312, %v1957
    %v1966 = vadd.f32 %v1317, %v1962
    %s1967 = scalar_lea.vmem %s1, 96
    %v1968 = vld [vmem:[%s1967] sm:$0xff]
    %v1969 = vld [vmem:[%s1967 + $0x8] sm:$0xff]
    %v1970 = vld [vmem:[%s1967 + $0x10] sm:$0xff]
    %v1971 = vld [vmem:[%s1967 + $0x18] sm:$0xff]
    %1972 = vmatprep.subr.mxu0 0.0
    %1973 = vmatpush1.msra.mxu0 %v1968
    %1974 = vmatprep.subr.mxu0 0.0
    %1975 = vmatpush1.msra.mxu0 %v1969
    %1976 = vmatprep.subr.mxu0 0.0
    %1977 = vmatpush1.msra.mxu0 %v1970
    %1978 = vmatprep.subr.mxu0 0.0
    %1979 = vmatpush1.msra.mxu0 %v1971
    %1980 = vmatprep.subr.mxu0 0.0
    %1981 = vmatpush1.msra.mxu0 0.0
    %1982 = vmatprep.subr.mxu0 0.0
    %1983 = vmatpush1.msra.mxu0 0.0
    %1984 = vmatprep.subr.mxu0 0.0
    %1985 = vmatpush1.msra.mxu0 0.0
    %1986 = vmatprep.subr.mxu0 0.0
    %1987 = vmatpush1.msra.mxu0 0.0
    %1988 = vmatprep.subr.mxu0 0.0
    %1989 = vmatpush1.msra.mxu0 0.0
    %1990 = vmatprep.subr.mxu0 0.0
    %1991 = vmatpush1.msra.mxu0 0.0
    %1992 = vmatprep.subr.mxu0 0.0
    %1993 = vmatpush1.msra.mxu0 0.0
    %1994 = vmatprep.subr.mxu0 0.0
    %1995 = vmatpush1.msra.mxu0 0.0
    %1996 = vmatprep.subr.mxu0 0.0
    %1997 = vmatpush1.msra.mxu0 0.0
    %1998 = vmatprep.subr.mxu0 0.0
    %1999 = vmatpush1.msra.mxu0 0.0
    %2000 = vmatprep.subr.mxu0 0.0
    %2001 = vmatpush1.msra.mxu0 0.0
    %2002 = vmatprep.subr.mxu0 0.0
    %2003 = vmatpush1.msra.mxu0 0.0
    %2004 = vmatprep.subr.mxu0 0.0
    %2005 = vmatpush1.msra.mxu0 0.0
    %2006 = vmatprep.subr.mxu0 0.0
    %2007 = vmatpush1.msra.mxu0 0.0
    %2008 = vmatprep.subr.mxu0 0.0
    %2009 = vmatpush1.msra.mxu0 0.0
    %2010 = vmatprep.subr.mxu0 0.0
    %2011 = vmatpush1.msra.mxu0 0.0
    %2012 = vmatprep.subr.mxu0 0.0
    %2013 = vmatpush1.msra.mxu0 0.0
    %2014 = vmatprep.subr.mxu0 0.0
    %2015 = vmatpush1.msra.mxu0 0.0
    %2016 = vmatprep.subr.mxu0 0.0
    %2017 = vmatpush1.msra.mxu0 0.0
    %2018 = vmatprep.subr.mxu0 0.0
    %2019 = vmatpush1.msra.mxu0 0.0
    %2020 = vmatprep.subr.mxu0 0.0
    %2021 = vmatpush1.msra.mxu0 0.0
    %2022 = vmatprep.subr.mxu0 0.0
    %2023 = vmatpush1.msra.mxu0 0.0
    %2024 = vmatprep.subr.mxu0 0.0
    %2025 = vmatpush1.msra.mxu0 0.0
    %2026 = vmatprep.subr.mxu0 0.0
    %2027 = vmatpush1.msra.mxu0 0.0
    %2028 = vmatprep.subr.mxu0 0.0
    %2029 = vmatpush1.msra.mxu0 0.0
    %2030 = vmatprep.subr.mxu0 0.0
    %2031 = vmatpush1.msra.mxu0 0.0
    %2032 = vmatprep.subr.mxu0 0.0
    %2033 = vmatpush1.msra.mxu0 0.0
    %2034 = vmatprep.subr.mxu0 0.0
    %2035 = vmatpush1.msra.mxu0 0.0
    %2036 = vmatprep.mubr.f32.mxu0 0.0
    %2037 = vmatmul.mubr.f32.gmra.mrb[0].mxu0 %v32
    %v2038 = vpop.f32.mrb[0].mxu0
    %v2039 = vadd.f32 0.0, %v2038
    %v2040 = vpop.f32.mrb[0].mxu0
    %2041 = vmatprep.mubr.f32.mxu0 0.0
    %2042 = vmatmul.mubr.f32.gmra.mrb[0].mxu0 %v35
    %v2043 = vpop.f32.mrb[0].mxu0
    %v2044 = vadd.f32 0.0, %v2043
    %v2045 = vpop.f32.mrb[0].mxu0
    %2046 = vdwg.mxu0
    %s2047 = scalar_lea.vmem %s2, 96
    %v2048 = vld [vmem:[%s2047] sm:$0xff]
    %v2049 = vld [vmem:[%s2047 + $0x8] sm:$0xff]
    %v2050 = vld [vmem:[%s2047 + $0x10] sm:$0xff]
    %v2051 = vld [vmem:[%s2047 + $0x18] sm:$0xff]
    %2052 = vmatprep.subr.mxu0 0.0
    %2053 = vmatpush1.msra.mxu0 %v2048
    %2054 = vmatprep.subr.mxu0 0.0
    %2055 = vmatpush1.msra.mxu0 %v2049
    %2056 = vmatprep.subr.mxu0 0.0
    %2057 = vmatpush1.msra.mxu0 %v2050
    %2058 = vmatprep.subr.mxu0 0.0
    %2059 = vmatpush1.msra.mxu0 %v2051
    %2060 = vmatprep.subr.mxu0 0.0
    %2061 = vmatpush1.msra.mxu0 0.0
    %2062 = vmatprep.subr.mxu0 0.0
    %2063 = vmatpush1.msra.mxu0 0.0
    %2064 = vmatprep.subr.mxu0 0.0
    %2065 = vmatpush1.msra.mxu0 0.0
    %2066 = vmatprep.subr.mxu0 0.0
    %2067 = vmatpush1.msra.mxu0 0.0
    %2068 = vmatprep.subr.mxu0 0.0
    %2069 = vmatpush1.msra.mxu0 0.0
    %2070 = vmatprep.subr.mxu0 0.0
    %2071 = vmatpush1.msra.mxu0 0.0
    %2072 = vmatprep.subr.mxu0 0.0
    %2073 = vmatpush1.msra.mxu0 0.0
    %2074 = vmatprep.subr.mxu0 0.0
    %2075 = vmatpush1.msra.mxu0 0.0
    %2076 = vmatprep.subr.mxu0 0.0
    %2077 = vmatpush1.msra.mxu0 0.0
    %2078 = vmatprep.subr.mxu0 0.0
    %2079 = vmatpush1.msra.mxu0 0.0
    %2080 = vmatprep.subr.mxu0 0.0
    %2081 = vmatpush1.msra.mxu0 0.0
    %2082 = vmatprep.subr.mxu0 0.0
    %2083 = vmatpush1.msra.mxu0 0.0
    %2084 = vmatprep.subr.mxu0 0.0
    %2085 = vmatpush1.msra.mxu0 0.0
    %2086 = vmatprep.subr.mxu0 0.0
    %2087 = vmatpush1.msra.mxu0 0.0
    %2088 = vmatprep.subr.mxu0 0.0
    %2089 = vmatpush1.msra.mxu0 0.0
    %2090 = vmatprep.subr.mxu0 0.0
    %2091 = vmatpush1.msra.mxu0 0.0
    %2092 = vmatprep.subr.mxu0 0.0
    %2093 = vmatpush1.msra.mxu0 0.0
    %2094 = vmatprep.subr.mxu0 0.0
    %2095 = vmatpush1.msra.mxu0 0.0
    %2096 = vmatprep.subr.mxu0 0.0
    %2097 = vmatpush1.msra.mxu0 0.0
    %2098 = vmatprep.subr.mxu0 0.0
    %2099 = vmatpush1.msra.mxu0 0.0
    %2100 = vmatprep.subr.mxu0 0.0
    %2101 = vmatpush1.msra.mxu0 0.0
    %2102 = vmatprep.subr.mxu0 0.0
    %2103 = vmatpush1.msra.mxu0 0.0
    %2104 = vmatprep.subr.mxu0 0.0
    %2105 = vmatpush1.msra.mxu0 0.0
    %2106 = vmatprep.subr.mxu0 0.0
    %2107 = vmatpush1.msra.mxu0 0.0
    %2108 = vmatprep.subr.mxu0 0.0
    %2109 = vmatpush1.msra.mxu0 0.0
    %2110 = vmatprep.subr.mxu0 0.0
    %2111 = vmatpush1.msra.mxu0 0.0
    %2112 = vmatprep.subr.mxu0 0.0
    %2113 = vmatpush1.msra.mxu0 0.0
    %2114 = vmatprep.subr.mxu0 0.0
    %2115 = vmatpush1.msra.mxu0 0.0
    %2116 = vmatprep.mubr.f32.mxu0 0.0
    %2117 = vmatmul.mubr.f32.gmra.mrb[0].mxu0 %v32
    %v2118 = vpop.f32.mrb[0].mxu0
    %v2119 = vadd.f32 0.0, %v2118
    %v2120 = vpop.f32.mrb[0].mxu0
    %2121 = vmatprep.mubr.f32.mxu0 0.0
    %2122 = vmatmul.mubr.f32.gmra.mrb[0].mxu0 %v35
    %v2123 = vpop.f32.mrb[0].mxu0
    %v2124 = vadd.f32 0.0, %v2123
    %v2125 = vpop.f32.mrb[0].mxu0
    %2126 = vdwg.mxu0
    %s2127 = scalar_lea.vmem %s3, 96
    %v2128 = vld [vmem:[%s2127] sm:$0xff]
    %v2129 = vld [vmem:[%s2127 + $0x8] sm:$0xff]
    %v2130 = vld [vmem:[%s2127 + $0x10] sm:$0xff]
    %v2131 = vld [vmem:[%s2127 + $0x18] sm:$0xff]
    %2132 = vmatprep.subr.mxu0 0.0
    %2133 = vmatpush1.msra.mxu0 %v2128
    %2134 = vmatprep.subr.mxu0 0.0
    %2135 = vmatpush1.msra.mxu0 %v2129
    %2136 = vmatprep.subr.mxu0 0.0
    %2137 = vmatpush1.msra.mxu0 %v2130
    %2138 = vmatprep.subr.mxu0 0.0
    %2139 = vmatpush1.msra.mxu0 %v2131
    %2140 = vmatprep.subr.mxu0 0.0
    %2141 = vmatpush1.msra.mxu0 0.0
    %2142 = vmatprep.subr.mxu0 0.0
    %2143 = vmatpush1.msra.mxu0 0.0
    %2144 = vmatprep.subr.mxu0 0.0
    %2145 = vmatpush1.msra.mxu0 0.0
    %2146 = vmatprep.subr.mxu0 0.0
    %2147 = vmatpush1.msra.mxu0 0.0
    %2148 = vmatprep.subr.mxu0 0.0
    %2149 = vmatpush1.msra.mxu0 0.0
    %2150 = vmatprep.subr.mxu0 0.0
    %2151 = vmatpush1.msra.mxu0 0.0
    %2152 = vmatprep.subr.mxu0 0.0
    %2153 = vmatpush1.msra.mxu0 0.0
    %2154 = vmatprep.subr.mxu0 0.0
    %2155 = vmatpush1.msra.mxu0 0.0
    %2156 = vmatprep.subr.mxu0 0.0
    %2157 = vmatpush1.msra.mxu0 0.0
    %2158 = vmatprep.subr.mxu0 0.0
    %2159 = vmatpush1.msra.mxu0 0.0
    %2160 = vmatprep.subr.mxu0 0.0
    %2161 = vmatpush1.msra.mxu0 0.0
    %2162 = vmatprep.subr.mxu0 0.0
    %2163 = vmatpush1.msra.mxu0 0.0
    %2164 = vmatprep.subr.mxu0 0.0
    %2165 = vmatpush1.msra.mxu0 0.0
    %2166 = vmatprep.subr.mxu0 0.0
    %2167 = vmatpush1.msra.mxu0 0.0
    %2168 = vmatprep.subr.mxu0 0.0
    %2169 = vmatpush1.msra.mxu0 0.0
    %2170 = vmatprep.subr.mxu0 0.0
    %2171 = vmatpush1.msra.mxu0 0.0
    %2172 = vmatprep.subr.mxu0 0.0
    %2173 = vmatpush1.msra.mxu0 0.0
    %2174 = vmatprep.subr.mxu0 0.0
    %2175 = vmatpush1.msra.mxu0 0.0
    %2176 = vmatprep.subr.mxu0 0.0
    %2177 = vmatpush1.msra.mxu0 0.0
    %2178 = vmatprep.subr.mxu0 0.0
    %2179 = vmatpush1.msra.mxu0 0.0
    %2180 = vmatprep.subr.mxu0 0.0
    %2181 = vmatpush1.msra.mxu0 0.0
    %2182 = vmatprep.subr.mxu0 0.0
    %2183 = vmatpush1.msra.mxu0 0.0
    %2184 = vmatprep.subr.mxu0 0.0
    %2185 = vmatpush1.msra.mxu0 0.0
    %2186 = vmatprep.subr.mxu0 0.0
    %2187 = vmatpush1.msra.mxu0 0.0
    %2188 = vmatprep.subr.mxu0 0.0
    %2189 = vmatpush1.msra.mxu0 0.0
    %2190 = vmatprep.subr.mxu0 0.0
    %2191 = vmatpush1.msra.mxu0 0.0
    %2192 = vmatprep.subr.mxu0 0.0
    %2193 = vmatpush1.msra.mxu0 0.0
    %2194 = vmatprep.subr.mxu0 0.0
    %2195 = vmatpush1.msra.mxu0 0.0
    %2196 = vmatprep.mubr.f32.mxu0 0.0
    %2197 = vmatmul.mubr.f32.gmra.mrb[0].mxu0 %v32
    %v2198 = vpop.f32.mrb[0].mxu0
    %v2199 = vadd.f32 0.0, %v2198
    %v2200 = vpop.f32.mrb[0].mxu0
    %2201 = vmatprep.mubr.f32.mxu0 0.0
    %2202 = vmatmul.mubr.f32.gmra.mrb[0].mxu0 %v35
    %v2203 = vpop.f32.mrb[0].mxu0
    %v2204 = vadd.f32 0.0, %v2203
    %v2205 = vpop.f32.mrb[0].mxu0
    %2206 = vdwg.mxu0
    %v2208 = vsel %vm270, %v2039, 0
    %v2211 = vsel %vm270, %v2119, 0
    %2213 = vmatprep.subr.mxu0 0.0
    %2214 = vmatpush1.xpose.msra.mxu0 %v2211
    %2215 = vmatprep.subr.mxu0 0.0
    %2216 = vmatpush1.xpose.msra.mxu0 0.0
    %2217 = vmatprep.subr.mxu0 0.0
    %2218 = vmatpush1.xpose.msra.mxu0 0.0
    %2219 = vmatprep.subr.mxu0 0.0
    %2220 = vmatpush1.xpose.msra.mxu0 0.0
    %2221 = vmatprep.subr.mxu0 0.0
    %2222 = vmatpush1.xpose.msra.mxu0 0.0
    %2223 = vmatprep.subr.mxu0 0.0
    %2224 = vmatpush1.xpose.msra.mxu0 0.0
    %2225 = vmatprep.subr.mxu0 0.0
    %2226 = vmatpush1.xpose.msra.mxu0 0.0
    %2227 = vmatprep.subr.mxu0 0.0
    %2228 = vmatpush1.xpose.msra.mxu0 0.0
    %2229 = vmatprep.subr.mxu0 0.0
    %2230 = vmatpush1.xpose.msra.mxu0 0.0
    %2231 = vmatprep.subr.mxu0 0.0
    %2232 = vmatpush1.xpose.msra.mxu0 0.0
    %2233 = vmatprep.subr.mxu0 0.0
    %2234 = vmatpush1.xpose.msra.mxu0 0.0
    %2235 = vmatprep.subr.mxu0 0.0
    %2236 = vmatpush1.xpose.msra.mxu0 0.0
    %2237 = vmatprep.subr.mxu0 0.0
    %2238 = vmatpush1.xpose.msra.mxu0 0.0
    %2239 = vmatprep.subr.mxu0 0.0
    %2240 = vmatpush1.xpose.msra.mxu0 0.0
    %2241 = vmatprep.subr.mxu0 0.0
    %2242 = vmatpush1.xpose.msra.mxu0 0.0
    %2243 = vmatprep.subr.mxu0 0.0
    %2244 = vmatpush1.xpose.msra.mxu0 0.0
    %2245 = vmatprep.subr.mxu0 0.0
    %2246 = vmatpush1.xpose.msra.mxu0 0.0
    %2247 = vmatprep.subr.mxu0 0.0
    %2248 = vmatpush1.xpose.msra.mxu0 0.0
    %2249 = vmatprep.subr.mxu0 0.0
    %2250 = vmatpush1.xpose.msra.mxu0 0.0
    %2251 = vmatprep.subr.mxu0 0.0
    %2252 = vmatpush1.xpose.msra.mxu0 0.0
    %2253 = vmatprep.subr.mxu0 0.0
    %2254 = vmatpush1.xpose.msra.mxu0 0.0
    %2255 = vmatprep.subr.mxu0 0.0
    %2256 = vmatpush1.xpose.msra.mxu0 0.0
    %2257 = vmatprep.subr.mxu0 0.0
    %2258 = vmatpush1.xpose.msra.mxu0 0.0
    %2259 = vmatprep.subr.mxu0 0.0
    %2260 = vmatpush1.xpose.msra.mxu0 0.0
    %2261 = vmatprep.subr.mxu0 0.0
    %2262 = vmatpush1.xpose.msra.mxu0 0.0
    %2263 = vmatprep.subr.mxu0 0.0
    %2264 = vmatpush1.xpose.msra.mxu0 0.0
    %2265 = vmatprep.subr.mxu0 0.0
    %2266 = vmatpush1.xpose.msra.mxu0 0.0
    %2267 = vmatprep.subr.mxu0 0.0
    %2268 = vmatpush1.xpose.msra.mxu0 0.0
    %2269 = vmatprep.subr.mxu0 0.0
    %2270 = vmatpush1.xpose.msra.mxu0 0.0
    %2271 = vmatprep.subr.mxu0 0.0
    %2272 = vmatpush1.xpose.msra.mxu0 0.0
    %2273 = vmatprep.subr.mxu0 0.0
    %2274 = vmatpush1.xpose.msra.mxu0 0.0
    %2275 = vmatprep.subr.mxu0 0.0
    %2276 = vmatpush1.xpose.msra.mxu0 0.0
    %2277 = vmatprep.mubr.f32.mxu0 0.0
    %2278 = vmatmul.mubr.f32.gmra.mrb[0].mxu0 %v2208
    %v2279 = vpop.f32.mrb[0].mxu0
    %v2280 = vadd.f32 0.0, %v2279
    %v2281 = vpop.f32.mrb[0].mxu0
    %2282 = vdwg.mxu0
    %v2284 = vsel %vm270, %v2044, 0
    %v2287 = vsel %vm270, %v2124, 0
    %2289 = vmatprep.subr.mxu0 0.0
    %2290 = vmatpush1.xpose.msra.mxu0 %v2287
    %2291 = vmatprep.subr.mxu0 0.0
    %2292 = vmatpush1.xpose.msra.mxu0 0.0
    %2293 = vmatprep.subr.mxu0 0.0
    %2294 = vmatpush1.xpose.msra.mxu0 0.0
    %2295 = vmatprep.subr.mxu0 0.0
    %2296 = vmatpush1.xpose.msra.mxu0 0.0
    %2297 = vmatprep.subr.mxu0 0.0
    %2298 = vmatpush1.xpose.msra.mxu0 0.0
    %2299 = vmatprep.subr.mxu0 0.0
    %2300 = vmatpush1.xpose.msra.mxu0 0.0
    %2301 = vmatprep.subr.mxu0 0.0
    %2302 = vmatpush1.xpose.msra.mxu0 0.0
    %2303 = vmatprep.subr.mxu0 0.0
    %2304 = vmatpush1.xpose.msra.mxu0 0.0
    %2305 = vmatprep.subr.mxu0 0.0
    %2306 = vmatpush1.xpose.msra.mxu0 0.0
    %2307 = vmatprep.subr.mxu0 0.0
    %2308 = vmatpush1.xpose.msra.mxu0 0.0
    %2309 = vmatprep.subr.mxu0 0.0
    %2310 = vmatpush1.xpose.msra.mxu0 0.0
    %2311 = vmatprep.subr.mxu0 0.0
    %2312 = vmatpush1.xpose.msra.mxu0 0.0
    %2313 = vmatprep.subr.mxu0 0.0
    %2314 = vmatpush1.xpose.msra.mxu0 0.0
    %2315 = vmatprep.subr.mxu0 0.0
    %2316 = vmatpush1.xpose.msra.mxu0 0.0
    %2317 = vmatprep.subr.mxu0 0.0
    %2318 = vmatpush1.xpose.msra.mxu0 0.0
    %2319 = vmatprep.subr.mxu0 0.0
    %2320 = vmatpush1.xpose.msra.mxu0 0.0
    %2321 = vmatprep.subr.mxu0 0.0
    %2322 = vmatpush1.xpose.msra.mxu0 0.0
    %2323 = vmatprep.subr.mxu0 0.0
    %2324 = vmatpush1.xpose.msra.mxu0 0.0
    %2325 = vmatprep.subr.mxu0 0.0
    %2326 = vmatpush1.xpose.msra.mxu0 0.0
    %2327 = vmatprep.subr.mxu0 0.0
    %2328 = vmatpush1.xpose.msra.mxu0 0.0
    %2329 = vmatprep.subr.mxu0 0.0
    %2330 = vmatpush1.xpose.msra.mxu0 0.0
    %2331 = vmatprep.subr.mxu0 0.0
    %2332 = vmatpush1.xpose.msra.mxu0 0.0
    %2333 = vmatprep.subr.mxu0 0.0
    %2334 = vmatpush1.xpose.msra.mxu0 0.0
    %2335 = vmatprep.subr.mxu0 0.0
    %2336 = vmatpush1.xpose.msra.mxu0 0.0
    %2337 = vmatprep.subr.mxu0 0.0
    %2338 = vmatpush1.xpose.msra.mxu0 0.0
    %2339 = vmatprep.subr.mxu0 0.0
    %2340 = vmatpush1.xpose.msra.mxu0 0.0
    %2341 = vmatprep.subr.mxu0 0.0
    %2342 = vmatpush1.xpose.msra.mxu0 0.0
    %2343 = vmatprep.subr.mxu0 0.0
    %2344 = vmatpush1.xpose.msra.mxu0 0.0
    %2345 = vmatprep.subr.mxu0 0.0
    %2346 = vmatpush1.xpose.msra.mxu0 0.0
    %2347 = vmatprep.subr.mxu0 0.0
    %2348 = vmatpush1.xpose.msra.mxu0 0.0
    %2349 = vmatprep.subr.mxu0 0.0
    %2350 = vmatpush1.xpose.msra.mxu0 0.0
    %2351 = vmatprep.subr.mxu0 0.0
    %2352 = vmatpush1.xpose.msra.mxu0 0.0
    %2353 = vmatprep.mubr.f32.mxu0 0.0
    %2354 = vmatmul.mubr.f32.gmra.mrb[0].mxu0 %v2284
    %v2355 = vpop.f32.mrb[0].mxu0
    %v2356 = vadd.f32 0.0, %v2355
    %v2357 = vpop.f32.mrb[0].mxu0
    %2358 = vdwg.mxu0
    %v2359 = vmul.f32 %v2280, 0.35355338
    %v2360 = vmul.f32 %v2356, 0.35355338
    %v2361 = vsel %vm270, %v2359, -inf
    %2362 = vmax.xlane.f32.xlu0 %v2361
    %v2363 = vpop.xlane.xlu0 %2362
    %v2364 = vsel %vm270, %v2360, -inf
    %2365 = vmax.xlane.f32.xlu0 %v2364
    %v2366 = vpop.xlane.xlu0 %2365
    %v2367 = vsub.f32 %v2359, %v2363
    %v2368 = vsub.f32 %v2360, %v2366
    %v2369 = vmul.f32 %v2367, 1.442695
    %v2370 = vpow.pop %v2369
    %v2371 = vmul.f32 %v2368, 1.442695
    %v2372 = vpow.pop %v2371
    %v2373 = vsel %vm270, %v2370, 0.0
    %2374 = vadd.xlane.f32.xlu0 %v2373
    %v2375 = vpop.xlane.xlu0 %2374
    %v2376 = vsel %vm270, %v2372, 0.0
    %2377 = vadd.xlane.f32.xlu0 %v2376
    %v2378 = vpop.xlane.xlu0 %2377
    %v2379 = vrcp.pop %v2375
    %v2380 = vrcp.pop %v2378
    %v2381 = vmul.f32 %v2370, %v2379
    %v2382 = vmul.f32 %v2372, %v2380
    %v2384 = vsel %vm270, %v2381, 0
    %2386 = vmatprep.subr.mxu0 0.0
    %2387 = vmatpush1.msra.mxu0 %v2199
    %2388 = vmatprep.subr.mxu0 0.0
    %2389 = vmatpush1.msra.mxu0 0.0
    %2390 = vmatprep.subr.mxu0 0.0
    %2391 = vmatpush1.msra.mxu0 0.0
    %2392 = vmatprep.subr.mxu0 0.0
    %2393 = vmatpush1.msra.mxu0 0.0
    %2394 = vmatprep.subr.mxu0 0.0
    %2395 = vmatpush1.msra.mxu0 0.0
    %2396 = vmatprep.subr.mxu0 0.0
    %2397 = vmatpush1.msra.mxu0 0.0
    %2398 = vmatprep.subr.mxu0 0.0
    %2399 = vmatpush1.msra.mxu0 0.0
    %2400 = vmatprep.subr.mxu0 0.0
    %2401 = vmatpush1.msra.mxu0 0.0
    %2402 = vmatprep.subr.mxu0 0.0
    %2403 = vmatpush1.msra.mxu0 0.0
    %2404 = vmatprep.subr.mxu0 0.0
    %2405 = vmatpush1.msra.mxu0 0.0
    %2406 = vmatprep.subr.mxu0 0.0
    %2407 = vmatpush1.msra.mxu0 0.0
    %2408 = vmatprep.subr.mxu0 0.0
    %2409 = vmatpush1.msra.mxu0 0.0
    %2410 = vmatprep.subr.mxu0 0.0
    %2411 = vmatpush1.msra.mxu0 0.0
    %2412 = vmatprep.subr.mxu0 0.0
    %2413 = vmatpush1.msra.mxu0 0.0
    %2414 = vmatprep.subr.mxu0 0.0
    %2415 = vmatpush1.msra.mxu0 0.0
    %2416 = vmatprep.subr.mxu0 0.0
    %2417 = vmatpush1.msra.mxu0 0.0
    %2418 = vmatprep.subr.mxu0 0.0
    %2419 = vmatpush1.msra.mxu0 0.0
    %2420 = vmatprep.subr.mxu0 0.0
    %2421 = vmatpush1.msra.mxu0 0.0
    %2422 = vmatprep.subr.mxu0 0.0
    %2423 = vmatpush1.msra.mxu0 0.0
    %2424 = vmatprep.subr.mxu0 0.0
    %2425 = vmatpush1.msra.mxu0 0.0
    %2426 = vmatprep.subr.mxu0 0.0
    %2427 = vmatpush1.msra.mxu0 0.0
    %2428 = vmatprep.subr.mxu0 0.0
    %2429 = vmatpush1.msra.mxu0 0.0
    %2430 = vmatprep.subr.mxu0 0.0
    %2431 = vmatpush1.msra.mxu0 0.0
    %2432 = vmatprep.subr.mxu0 0.0
    %2433 = vmatpush1.msra.mxu0 0.0
    %2434 = vmatprep.subr.mxu0 0.0
    %2435 = vmatpush1.msra.mxu0 0.0
    %2436 = vmatprep.subr.mxu0 0.0
    %2437 = vmatpush1.msra.mxu0 0.0
    %2438 = vmatprep.subr.mxu0 0.0
    %2439 = vmatpush1.msra.mxu0 0.0
    %2440 = vmatprep.subr.mxu0 0.0
    %2441 = vmatpush1.msra.mxu0 0.0
    %2442 = vmatprep.subr.mxu0 0.0
    %2443 = vmatpush1.msra.mxu0 0.0
    %2444 = vmatprep.subr.mxu0 0.0
    %2445 = vmatpush1.msra.mxu0 0.0
    %2446 = vmatprep.subr.mxu0 0.0
    %2447 = vmatpush1.msra.mxu0 0.0
    %2448 = vmatprep.subr.mxu0 0.0
    %2449 = vmatpush1.msra.mxu0 0.0
    %2450 = vmatprep.mubr.f32.mxu0 0.0
    %2451 = vmatmul.mubr.f32.gmra.mrb[0].mxu0 %v2384
    %v2452 = vpop.f32.mrb[0].mxu0
    %v2453 = vadd.f32 0.0, %v2452
    %v2454 = vpop.f32.mrb[0].mxu0
    %2455 = vdwg.mxu0
    %v2457 = vsel %vm270, %v2382, 0
    %2459 = vmatprep.subr.mxu0 0.0
    %2460 = vmatpush1.msra.mxu0 %v2204
    %2461 = vmatprep.subr.mxu0 0.0
    %2462 = vmatpush1.msra.mxu0 0.0
    %2463 = vmatprep.subr.mxu0 0.0
    %2464 = vmatpush1.msra.mxu0 0.0
    %2465 = vmatprep.subr.mxu0 0.0
    %2466 = vmatpush1.msra.mxu0 0.0
    %2467 = vmatprep.subr.mxu0 0.0
    %2468 = vmatpush1.msra.mxu0 0.0
    %2469 = vmatprep.subr.mxu0 0.0
    %2470 = vmatpush1.msra.mxu0 0.0
    %2471 = vmatprep.subr.mxu0 0.0
    %2472 = vmatpush1.msra.mxu0 0.0
    %2473 = vmatprep.subr.mxu0 0.0
    %2474 = vmatpush1.msra.mxu0 0.0
    %2475 = vmatprep.subr.mxu0 0.0
    %2476 = vmatpush1.msra.mxu0 0.0
    %2477 = vmatprep.subr.mxu0 0.0
    %2478 = vmatpush1.msra.mxu0 0.0
    %2479 = vmatprep.subr.mxu0 0.0
    %2480 = vmatpush1.msra.mxu0 0.0
    %2481 = vmatprep.subr.mxu0 0.0
    %2482 = vmatpush1.msra.mxu0 0.0
    %2483 = vmatprep.subr.mxu0 0.0
    %2484 = vmatpush1.msra.mxu0 0.0
    %2485 = vmatprep.subr.mxu0 0.0
    %2486 = vmatpush1.msra.mxu0 0.0
    %2487 = vmatprep.subr.mxu0 0.0
    %2488 = vmatpush1.msra.mxu0 0.0
    %2489 = vmatprep.subr.mxu0 0.0
    %2490 = vmatpush1.msra.mxu0 0.0
    %2491 = vmatprep.subr.mxu0 0.0
    %2492 = vmatpush1.msra.mxu0 0.0
    %2493 = vmatprep.subr.mxu0 0.0
    %2494 = vmatpush1.msra.mxu0 0.0
    %2495 = vmatprep.subr.mxu0 0.0
    %2496 = vmatpush1.msra.mxu0 0.0
    %2497 = vmatprep.subr.mxu0 0.0
    %2498 = vmatpush1.msra.mxu0 0.0
    %2499 = vmatprep.subr.mxu0 0.0
    %2500 = vmatpush1.msra.mxu0 0.0
    %2501 = vmatprep.subr.mxu0 0.0
    %2502 = vmatpush1.msra.mxu0 0.0
    %2503 = vmatprep.subr.mxu0 0.0
    %2504 = vmatpush1.msra.mxu0 0.0
    %2505 = vmatprep.subr.mxu0 0.0
    %2506 = vmatpush1.msra.mxu0 0.0
    %2507 = vmatprep.subr.mxu0 0.0
    %2508 = vmatpush1.msra.mxu0 0.0
    %2509 = vmatprep.subr.mxu0 0.0
    %2510 = vmatpush1.msra.mxu0 0.0
    %2511 = vmatprep.subr.mxu0 0.0
    %2512 = vmatpush1.msra.mxu0 0.0
    %2513 = vmatprep.subr.mxu0 0.0
    %2514 = vmatpush1.msra.mxu0 0.0
    %2515 = vmatprep.subr.mxu0 0.0
    %2516 = vmatpush1.msra.mxu0 0.0
    %2517 = vmatprep.subr.mxu0 0.0
    %2518 = vmatpush1.msra.mxu0 0.0
    %2519 = vmatprep.subr.mxu0 0.0
    %2520 = vmatpush1.msra.mxu0 0.0
    %2521 = vmatprep.subr.mxu0 0.0
    %2522 = vmatpush1.msra.mxu0 0.0
    %2523 = vmatprep.mubr.f32.mxu0 0.0
    %2524 = vmatmul.mubr.f32.gmra.mrb[0].mxu0 %v2457
    %v2525 = vpop.f32.mrb[0].mxu0
    %v2526 = vadd.f32 0.0, %v2525
    %v2527 = vpop.f32.mrb[0].mxu0
    %2528 = vdwg.mxu0
    %s2529 = scalar_lea.vmem %s4, 24
    %v2530 = vld [vmem:[%s2529] sm:$0xff]
    %v2532 = vsel %vm270, %v2453, 0
    %v2535 = vsel %vm270, %v2526, 0
    %2537 = vmatprep.subr.mxu0 0.0
    %2538 = vmatpush1.msra.mxu0 %v2530
    %2539 = vmatprep.subr.mxu0 0.0
    %2540 = vmatpush1.msra.mxu0 0.0
    %2541 = vmatprep.subr.mxu0 0.0
    %2542 = vmatpush1.msra.mxu0 0.0
    %2543 = vmatprep.subr.mxu0 0.0
    %2544 = vmatpush1.msra.mxu0 0.0
    %2545 = vmatprep.subr.mxu0 0.0
    %2546 = vmatpush1.msra.mxu0 0.0
    %2547 = vmatprep.subr.mxu0 0.0
    %2548 = vmatpush1.msra.mxu0 0.0
    %2549 = vmatprep.subr.mxu0 0.0
    %2550 = vmatpush1.msra.mxu0 0.0
    %2551 = vmatprep.subr.mxu0 0.0
    %2552 = vmatpush1.msra.mxu0 0.0
    %2553 = vmatprep.subr.mxu0 0.0
    %2554 = vmatpush1.msra.mxu0 0.0
    %2555 = vmatprep.subr.mxu0 0.0
    %2556 = vmatpush1.msra.mxu0 0.0
    %2557 = vmatprep.subr.mxu0 0.0
    %2558 = vmatpush1.msra.mxu0 0.0
    %2559 = vmatprep.subr.mxu0 0.0
    %2560 = vmatpush1.msra.mxu0 0.0
    %2561 = vmatprep.subr.mxu0 0.0
    %2562 = vmatpush1.msra.mxu0 0.0
    %2563 = vmatprep.subr.mxu0 0.0
    %2564 = vmatpush1.msra.mxu0 0.0
    %2565 = vmatprep.subr.mxu0 0.0
    %2566 = vmatpush1.msra.mxu0 0.0
    %2567 = vmatprep.subr.mxu0 0.0
    %2568 = vmatpush1.msra.mxu0 0.0
    %2569 = vmatprep.subr.mxu0 0.0
    %2570 = vmatpush1.msra.mxu0 0.0
    %2571 = vmatprep.subr.mxu0 0.0
    %2572 = vmatpush1.msra.mxu0 0.0
    %2573 = vmatprep.subr.mxu0 0.0
    %2574 = vmatpush1.msra.mxu0 0.0
    %2575 = vmatprep.subr.mxu0 0.0
    %2576 = vmatpush1.msra.mxu0 0.0
    %2577 = vmatprep.subr.mxu0 0.0
    %2578 = vmatpush1.msra.mxu0 0.0
    %2579 = vmatprep.subr.mxu0 0.0
    %2580 = vmatpush1.msra.mxu0 0.0
    %2581 = vmatprep.subr.mxu0 0.0
    %2582 = vmatpush1.msra.mxu0 0.0
    %2583 = vmatprep.subr.mxu0 0.0
    %2584 = vmatpush1.msra.mxu0 0.0
    %2585 = vmatprep.subr.mxu0 0.0
    %2586 = vmatpush1.msra.mxu0 0.0
    %2587 = vmatprep.subr.mxu0 0.0
    %2588 = vmatpush1.msra.mxu0 0.0
    %2589 = vmatprep.subr.mxu0 0.0
    %2590 = vmatpush1.msra.mxu0 0.0
    %2591 = vmatprep.subr.mxu0 0.0
    %2592 = vmatpush1.msra.mxu0 0.0
    %2593 = vmatprep.subr.mxu0 0.0
    %2594 = vmatpush1.msra.mxu0 0.0
    %2595 = vmatprep.subr.mxu0 0.0
    %2596 = vmatpush1.msra.mxu0 0.0
    %2597 = vmatprep.subr.mxu0 0.0
    %2598 = vmatpush1.msra.mxu0 0.0
    %2599 = vmatprep.subr.mxu0 0.0
    %2600 = vmatpush1.msra.mxu0 0.0
    %2601 = vmatprep.mubr.f32.mxu0 0.0
    %2602 = vmatmul.mubr.f32.gmra.mrb[0].mxu0 %v2532
    %v2603 = vpop.f32.mrb[0].mxu0
    %v2604 = vadd.f32 0.0, %v2603
    %v2605 = vpop.f32.mrb[0].mxu0
    %2606 = vmatprep.mubr.f32.mxu0 0.0
    %2607 = vmatmul.mubr.f32.gmra.mrb[0].mxu0 %v2535
    %v2608 = vpop.f32.mrb[0].mxu0
    %v2609 = vadd.f32 0.0, %v2608
    %v2610 = vpop.f32.mrb[0].mxu0
    %2611 = vdwg.mxu0
    %v2612 = vadd.f32 %v1965, %v2604
    %v2613 = vadd.f32 %v1966, %v2609
    %v2614 = vld [vmem:[%s5] sm:$0x1]
    %v2616 = vlaneseq
    %v2617 = vshrl.u32 %v2616, 7
    %v2618 = vsub.s32 0, %v2617
    %v2619 = vrot.slane %v2614, %v2618
    %v2621 = vadd.f32 %v2612, %v2619
    %v2622 = vadd.f32 %v2613, %v2619
    %2623 = vst.msk [vmem:[#allocation2] sm:$0xff] %vm30, %v2621
    %2624 = vst.msk [vmem:[#allocation2 + $0x8] sm:$0xff] %vm30, %v2622
    // Predicated region
    $region26: #{tpu_custom_call.1} parent=1 // pred_check
      _
    $region27: #{tpu_custom_call.1} parent=1 // pred_check_branch
      %2626 = sbr.rel (0) target = $region29
    $region28: #{tpu_custom_call.1} parent=1 // pred_region
      %s2628 = ssub.s32 256, 256
      %2629 = vsyncadd [#allocation3], %s2628
      %s2630 = sshll.u32 [#allocation2], 4
      %s2631 = int_to_ptr.vmem [resolvable:$true] %s2630
      %2636 = dma.vmem_to_hbm [thread:$0]  %s2631, 256, %s6, [#allocation3], 128, 128, 8
    $region29: #{tpu_custom_call.1} parent=1 // pred_fallthru
      _
    // Predicated region
    $region30: #{tpu_custom_call.1} parent=1 // pred_check
      _
    $region31: #{tpu_custom_call.1} parent=1 // pred_check_branch
      %2638 = sbr.rel (0) target = $region33
    $region32: #{tpu_custom_call.1} parent=1 // pred_region
      %2639 = dma.done [#allocation3], 256
    $region33: #{tpu_custom_call.1} parent=1 // pred_fallthru
      _
    %2640 = vsyncpa [#allocation3], 1

</llo_original>
